<compile_context>
chip_gen: v7x
topology: tpu7x:2x2x1
jax: 0.10.0
libtpu: 0.0.40
codegen_flags: <defaults>
</compile_context>

<pallas_src>
import functools

import jax
import jax.numpy as jnp
from jax.experimental import pallas as pl
from jax.experimental.pallas import tpu as pltpu

LATENT = 128
H1 = 256
H2 = 128
NPAD = 128  # padded output lanes (>= num_classes, multiple of 128)


def mlp_kernel(x_ref, w1_ref, w2_ref, w3_ref, vec_ref, out_ref):
    # vec_ref layout (1, 512) f32:  [ shift1 (256) | shift2 (128) | b3_pad (128) ]
    x = x_ref[...].astype(jnp.bfloat16)                                  # (TB, 128)

    # ---- Layer 1: Linear(128 -> 256) folded with BN1, then ReLU ----
    h = jnp.dot(x, w1_ref[...], preferred_element_type=jnp.float32)     # (TB, 256) f32
    h = jnp.maximum(h + vec_ref[:, 0:H1], 0.0)
    # Dropout(p=0.2): identity in eval mode.
    # TODO(synk): training-mode dropout (pltpu.prng_random_bits mask) not emitted here.

    # ---- Layer 2: Linear(256 -> 128) folded with BN2, then ReLU ----
    h = jnp.dot(h.astype(jnp.bfloat16), w2_ref[...],
                preferred_element_type=jnp.float32)                      # (TB, 128) f32
    h = jnp.maximum(h + vec_ref[:, H1:H1 + H2], 0.0)

    # ---- Layer 3: Linear(128 -> 10), zero-padded to 128 output lanes ----
    y = jnp.dot(h.astype(jnp.bfloat16), w3_ref[...],
                preferred_element_type=jnp.float32)                      # (TB, 128) f32
    out_ref[...] = (y + vec_ref[:, H1 + H2:H1 + H2 + NPAD]).astype(out_ref.dtype)


def prepare_params(params):
    """One-time fold: BN -> weights/shifts, pad layer 3 to 128 lanes, bf16 matmul inputs.

    Call once and reuse the result across forwards (hoisted out of the hot path).
    Returns (w1f, w2f, w3p, vec, num_classes).
    """
    (w1, b1, s1, t1, w2, b2, s2, t2, w3, b3) = params
    num_classes = int(w3.shape[1])
    assert num_classes <= NPAD

    w1f = (w1 * s1).astype(jnp.bfloat16)            # (128, 256)
    shift1 = (b1 * s1 + t1).astype(jnp.float32)     # (1, 256)
    w2f = (w2 * s2).astype(jnp.bfloat16)            # (256, 128)
    shift2 = (b2 * s2 + t2).astype(jnp.float32)     # (1, 128)

    pad = NPAD - num_classes
    w3p = jnp.pad(w3, ((0, 0), (0, pad))).astype(jnp.bfloat16)   # (128, 128)
    b3p = jnp.pad(b3, ((0, 0), (0, pad))).astype(jnp.float32)    # (1, 128)

    vec = jnp.concatenate([shift1, shift2, b3p], axis=1)         # (1, 512)
    return w1f, w2f, w3p, vec, num_classes


def _pick_batch_tile(batch):
    """Biggest useful tile, grid length >= 2 when B > 256, capped at 1024."""
    if batch <= 256:
        return max(8, -(-batch // 8) * 8)            # single ragged block, sublane-aligned
    tile = -(-(-(-batch // 2)) // 256) * 256         # round_up(ceil(B/2), 256)
    return min(1024, tile)


@jax.jit
def cifar10_forward_padded(x, w1f, w2f, w3p, vec):
    """x: (B, 128) f32 or bf16. Returns the padded (B, 128) bf16 logits slab.

    Preferred entry point for fused consumers (argmax/softmax/loss over the
    slab): avoids the extra HBM pass of the [:, :num_classes] slice.
    """
    B, latent_dim = x.shape
    tile = _pick_batch_tile(B)
    grid = (pl.cdiv(B, tile),)

    in_specs = [
        pl.BlockSpec((tile, latent_dim), lambda i: (i, 0)),        # x tile
        pl.BlockSpec(w1f.shape, lambda i: (0, 0)),                 # grid-invariant
        pl.BlockSpec(w2f.shape, lambda i: (0, 0)),
        pl.BlockSpec(w3p.shape, lambda i: (0, 0)),
        pl.BlockSpec(vec.shape, lambda i: (0, 0)),
    ]
    out_spec = pl.BlockSpec((tile, NPAD), lambda i: (i, 0))

    flops = 2 * B * (latent_dim * H1 + H1 * H2 + H2 * NPAD)
    bytes_accessed = (x.size * x.dtype.itemsize        # input read
                      + B * NPAD * 2                   # bf16 logits writeback
                      + w1f.size * 2 + w2f.size * 2 + w3p.size * 2 + vec.size * 4)

    return pl.pallas_call(
        mlp_kernel,
        out_shape=jax.ShapeDtypeStruct((B, NPAD), jnp.bfloat16),
        grid_spec=pltpu.PrefetchScalarGridSpec(
            num_scalar_prefetch=0,
            grid=grid,
            in_specs=in_specs,
            out_specs=out_spec,
        ),
        compiler_params=pltpu.CompilerParams(
            dimension_semantics=("parallel",)),
        cost_estimate=pl.CostEstimate(
            flops=flops, transcendentals=0, bytes_accessed=bytes_accessed),
    )(x, w1f, w2f, w3p, vec)


def cifar10_classifier_forward(x, folded):
    """Module-faithful API: returns (B, num_classes) float32 logits.

    Adds one small slice/cast pass over the output; latency-sensitive callers
    should consume the padded bf16 slab from cifar10_forward_padded directly.
    """
    w1f, w2f, w3p, vec, num_classes = folded
    slab = cifar10_forward_padded(x, w1f, w2f, w3p, vec)
    return slab[:, :num_classes].astype(jnp.float32)


def make_params(key, latent_dim=128, num_classes=10):
    """Deterministic synthetic parameters (shapes follow the PyTorch module)."""
    dims = [(latent_dim, H1), (H1, H2), (H2, num_classes)]
    keys = jax.random.split(key, 16)
    ki = iter(range(16))

    def linear(shape):
        fan_in = shape[0]
        bound = 1.0 / jnp.sqrt(fan_in)
        w = jax.random.uniform(keys[next(ki)], shape, jnp.float32, -bound, bound)
        b = jax.random.uniform(keys[next(ki)], (1, shape[1]), jnp.float32, -bound, bound)
        return w, b

    def bn(n, eps=1e-5):
        gamma = jnp.ones((1, n), jnp.float32)
        beta = jnp.zeros((1, n), jnp.float32)
        running_mean = 0.1 * jax.random.normal(keys[next(ki)], (1, n), jnp.float32)
        running_var = 1.0 + 0.1 * jax.random.uniform(keys[next(ki)], (1, n), jnp.float32)
        scale = gamma / jnp.sqrt(running_var + eps)          # folded BN scale
        shift = beta - running_mean * scale                  # folded BN shift
        return scale, shift

    w1, b1 = linear(dims[0]); s1, t1 = bn(dims[0][1])
    w2, b2 = linear(dims[1]); s2, t2 = bn(dims[1][1])
    w3, b3 = linear(dims[2])
    return (w1, b1, s1, t1, w2, b2, s2, t2, w3, b3)


def reference_forward(x, params):
    """Pure-JAX f32 reference, matching the original (unfolded) module math."""
    (w1, b1, s1, t1, w2, b2, s2, t2, w3, b3) = params
    h = jnp.maximum((x @ w1 + b1) * s1 + t1, 0.0)
    h = jnp.maximum((h @ w2 + b2) * s2 + t2, 0.0)
    return h @ w3 + b3


if __name__ == "__main__":
    key = jax.random.PRNGKey(0)
    k_x, k_p = jax.random.split(key)

    # B=300: exercises both the ragged last block (no x padding) and a
    # grid of length 2 ("parallel" -> both v7x TensorCores get a tile).
    B, NUM_CLASSES = 300, 10
    x = jax.random.normal(k_x, (B, LATENT), jnp.float32)
    params = make_params(k_p, latent_dim=LATENT, num_classes=NUM_CLASSES)

    # One-time parameter folding (hoisted out of the per-call path).
    folded = prepare_params(params)
    folded = (jax.block_until_ready(folded[0]), folded[1], folded[2], folded[3], folded[4])

    out = cifar10_classifier_forward(x, folded)
    out = jax.block_until_ready(out)

    ref = reference_forward(x, params)
    assert out.shape == (B, NUM_CLASSES)
    # bf16 matmul inputs + bf16 logits writeback (f32 accumulation) -> loosened
    # tolerance vs the f32 reference.
    assert jnp.allclose(out, ref, atol=6e-2, rtol=6e-2), "mismatch vs reference"

    print("KERNEL_OK")
</pallas_src>

<mosaic_0001>
module attributes {stable_mosaic.version = 11 : i64} {
  func.func @mlp_kernel(%arg0: i32, %arg1: memref<256x128xf32, #tpu.memory_space<vmem>>, %arg2: memref<128x256xbf16, #tpu.memory_space<vmem>>, %arg3: memref<256x128xbf16, #tpu.memory_space<vmem>>, %arg4: memref<128x128xbf16, #tpu.memory_space<vmem>>, %arg5: memref<1x512xf32, #tpu.memory_space<vmem>>, %arg6: memref<256x128xbf16, #tpu.memory_space<vmem>>) attributes {dimension_semantics = [#tpu.dimension_semantics<parallel>], iteration_bounds = array<i64: 2>, scalar_prefetch = 0 : i64, scratch_operands = 0 : i64, tpu.core_type = #tpu.core_type<tc>, window_params = [{transform_indices = @transform_0, window_bounds = array<i64: 256, 128>}, {pipeline_mode = #tpu.pipeline_mode<synchronous>, transform_indices = @transform_1, window_bounds = array<i64: 128, 256>}, {pipeline_mode = #tpu.pipeline_mode<synchronous>, transform_indices = @transform_2, window_bounds = array<i64: 256, 128>}, {pipeline_mode = #tpu.pipeline_mode<synchronous>, transform_indices = @transform_3, window_bounds = array<i64: 128, 128>}, {pipeline_mode = #tpu.pipeline_mode<synchronous>, transform_indices = @transform_4, window_bounds = array<i64: 1, 512>}, {transform_indices = @transform_5, window_bounds = array<i64: 256, 128>}]} {
    %c0 = arith.constant 0 : index
    %c0_0 = arith.constant 0 : index
    %0 = vector.load %arg1[%c0, %c0_0] : memref<256x128xf32, #tpu.memory_space<vmem>>, vector<256x128xf32>
    %1 = arith.truncf %0 : vector<256x128xf32> to vector<256x128xbf16>
    %c0_1 = arith.constant 0 : index
    %c0_2 = arith.constant 0 : index
    %2 = vector.load %arg2[%c0_1, %c0_2] : memref<128x256xbf16, #tpu.memory_space<vmem>>, vector<128x256xbf16>
    %cst = arith.constant dense<0.000000e+00> : vector<256x256xf32>
    %3 = tpu.matmul %1, %2, %cst {dimension_numbers = #tpu.dot_dimension_numbers<[1], [0], [0], [1], [0, 0, 1, 1], [], []>} : vector<256x128xbf16>, vector<128x256xbf16>, vector<256x256xf32> -> vector<256x256xf32>
    %c0_3 = arith.constant 0 : index
    %c0_4 = arith.constant 0 : index
    %4 = vector.load %arg5[%c0_3, %c0_4] : memref<1x512xf32, #tpu.memory_space<vmem>>, vector<1x256xf32>
    %5 = vector.broadcast %4 : vector<1x256xf32> to vector<256x256xf32>
    %6 = arith.addf %3, %5 : vector<256x256xf32>
    %cst_5 = arith.constant 0.000000e+00 : f32
    %7 = vector.broadcast %cst_5 : f32 to vector<256x256xf32>
    %8 = arith.maximumf %6, %7 : vector<256x256xf32>
    %9 = arith.truncf %8 : vector<256x256xf32> to vector<256x256xbf16>
    %c0_6 = arith.constant 0 : index
    %c0_7 = arith.constant 0 : index
    %10 = vector.load %arg3[%c0_6, %c0_7] : memref<256x128xbf16, #tpu.memory_space<vmem>>, vector<256x128xbf16>
    %cst_8 = arith.constant dense<0.000000e+00> : vector<256x128xf32>
    %11 = tpu.matmul %9, %10, %cst_8 {dimension_numbers = #tpu.dot_dimension_numbers<[1], [0], [0], [1], [0, 0, 1, 1], [], []>} : vector<256x256xbf16>, vector<256x128xbf16>, vector<256x128xf32> -> vector<256x128xf32>
    %c0_9 = arith.constant 0 : index
    %c256 = arith.constant 256 : index
    %12 = vector.load %arg5[%c0_9, %c256] : memref<1x512xf32, #tpu.memory_space<vmem>>, vector<1x128xf32>
    %13 = vector.broadcast %12 : vector<1x128xf32> to vector<256x128xf32>
    %14 = arith.addf %11, %13 : vector<256x128xf32>
    %cst_10 = arith.constant 0.000000e+00 : f32
    %15 = vector.broadcast %cst_10 : f32 to vector<256x128xf32>
    %16 = arith.maximumf %14, %15 : vector<256x128xf32>
    %17 = arith.truncf %16 : vector<256x128xf32> to vector<256x128xbf16>
    %c0_11 = arith.constant 0 : index
    %c0_12 = arith.constant 0 : index
    %18 = vector.load %arg4[%c0_11, %c0_12] : memref<128x128xbf16, #tpu.memory_space<vmem>>, vector<128x128xbf16>
    %cst_13 = arith.constant dense<0.000000e+00> : vector<256x128xf32>
    %19 = tpu.matmul %17, %18, %cst_13 {dimension_numbers = #tpu.dot_dimension_numbers<[1], [0], [0], [1], [0, 0, 1, 1], [], []>} : vector<256x128xbf16>, vector<128x128xbf16>, vector<256x128xf32> -> vector<256x128xf32>
    %c0_14 = arith.constant 0 : index
    %c384 = arith.constant 384 : index
    %20 = vector.load %arg5[%c0_14, %c384] : memref<1x512xf32, #tpu.memory_space<vmem>>, vector<1x128xf32>
    %21 = vector.broadcast %20 : vector<1x128xf32> to vector<256x128xf32>
    %22 = arith.addf %19, %21 : vector<256x128xf32>
    %23 = arith.truncf %22 : vector<256x128xf32> to vector<256x128xbf16>
    %c0_15 = arith.constant 0 : index
    %c0_16 = arith.constant 0 : index
    %24 = vector.load %arg6[%c0_15, %c0_16] : memref<256x128xbf16, #tpu.memory_space<vmem>>, vector<256x128xbf16>
    tpu.vector_store %arg6[%c0_15, %c0_16], %23 {strides = array<i32>} : memref<256x128xbf16, #tpu.memory_space<vmem>>, vector<256x128xbf16>,
    return
  }
  func.func @transform_0(%arg0: i32) -> (i32, i32) {
    %c0_i32 = arith.constant 0 : i32
    %c0_i32_0 = arith.constant 0 : i32
    return %arg0, %c0_i32 : i32, i32
  }
  func.func @transform_1(%arg0: i32) -> (i32, i32) {
    %c0_i32 = arith.constant 0 : i32
    %c0_i32_0 = arith.constant 0 : i32
    %c0_i32_1 = arith.constant 0 : i32
    return %c0_i32, %c0_i32_0 : i32, i32
  }
  func.func @transform_2(%arg0: i32) -> (i32, i32) {
    %c0_i32 = arith.constant 0 : i32
    %c0_i32_0 = arith.constant 0 : i32
    %c0_i32_1 = arith.constant 0 : i32
    return %c0_i32, %c0_i32_0 : i32, i32
  }
  func.func @transform_3(%arg0: i32) -> (i32, i32) {
    %c0_i32 = arith.constant 0 : i32
    %c0_i32_0 = arith.constant 0 : i32
    %c0_i32_1 = arith.constant 0 : i32
    return %c0_i32, %c0_i32_0 : i32, i32
  }
  func.func @transform_4(%arg0: i32) -> (i32, i32) {
    %c0_i32 = arith.constant 0 : i32
    %c0_i32_0 = arith.constant 0 : i32
    %c0_i32_1 = arith.constant 0 : i32
    return %c0_i32, %c0_i32_0 : i32, i32
  }
  func.func @transform_5(%arg0: i32) -> (i32, i32) {
    %c0_i32 = arith.constant 0 : i32
    %c0_i32_0 = arith.constant 0 : i32
    return %arg0, %c0_i32 : i32, i32
  }
}

</mosaic_0001>

<llo_original>
// kernel: cifar10_forward_padded.1
$region0: #{cifar10_forward_padded.1}
  #allocation0 [shape = 'u32[]', space=smem, size = 0x4, offset = 0x4, fixed_abs, tag = 'smem constant byte address 0x4 - core index']
  #allocation1 [shape = 'u32[144,128]{1,0:T(1,128)}', space=vmem, size = 0x12000, scoped, tag = 'internal scratch']
  %s0 = inlined_call_operand.hbm [shape: f32[300,128], index: 0, kind: input, shape index: {}]
  %s1 = inlined_call_operand.hbm [shape: bf16[128,256], index: 1, kind: input, shape index: {}]
  %s2 = inlined_call_operand.hbm [shape: bf16[256,128], index: 2, kind: input, shape index: {}]
  %s3 = inlined_call_operand.hbm [shape: bf16[128,128], index: 3, kind: input, shape index: {}]
  %s4 = inlined_call_operand.vmem [shape: f32[1,512], index: 4, kind: input, shape index: {}]
  %s5 = inlined_call_operand.hbm [shape: bf16[300,128], index: 5, kind: output, shape index: {}]
  %s6 = sld [smem:[#allocation0]]
  $region69: #{cifar10_forward_padded.1} parent=0
    _
  %s8 = ssub.s32 1, %s6
  %s9 = scalar_select 0, %s8, %s6
  $region1: #{cifar10_forward_padded.1} parent=0
    #allocation2 [shape = 'u8[262144]{0}', space=vmem, size = 0x40000, scoped, tag = 'input window, operand 0']
    #allocation3 [shape = 's32[2]{0}', space=sflag, size = 0x8, scoped, tag = 'scoped memory for cifar10_forward_padded.1']
    #allocation4 [shape = 's32[2]{0}', space=sflag, size = 0x8, scoped, tag = 'scoped memory for cifar10_forward_padded.1']
    #allocation5 [shape = 'u8[65536]{0}', space=vmem, size = 0x10000, scoped, tag = 'input window, operand 1, single buffered']
    #allocation6 [shape = 's32[1]{0}', space=sflag, size = 0x4, scoped, tag = 'scoped memory for cifar10_forward_padded.1']
    #allocation7 [shape = 'u8[65536]{0}', space=vmem, size = 0x10000, scoped, tag = 'input window, operand 2, single buffered']
    #allocation8 [shape = 'u8[32768]{0}', space=vmem, size = 0x8000, scoped, tag = 'input window, operand 3, single buffered']
    #allocation9 [shape = 's32[1]{0}', space=sflag, size = 0x4, scoped, tag = 'scoped memory for cifar10_forward_padded.1']
    #allocation10 [shape = 'u8[131072]{0}', space=vmem, size = 0x20000, scoped, tag = 'output window, operand 0']
    %10 = vsyncpa [#allocation3], 0
    %s11 = scalar_lea.sflag [#allocation3], 1
    %12 = vsyncpa %s11, 0
    %13 = vsyncpa [#allocation6], 0
    %14 = vsyncpa [#allocation9], 0
    %15 = vsyncpa [#allocation4], 0
    %s16 = scalar_lea.sflag [#allocation4], 1
    %17 = vsyncpa %s16, 0
    loop: start=0, step=1, limit=4
    $region2: #{cifar10_forward_padded.1} parent=1 // loop_pre_header
      _
    $region3: #{cifar10_forward_padded.1} parent=1 // loop_header
      %s19 = sphi 0, %s23
      %p20 = scmp.ge.s32.totalorder %s19, 4
      %s29 = sphi 0, %s31
      %s32 = sphi 0, %s29
      %s33 = sphi 0, %s32
      %s49 = sphi 0, %s33
      %s53 = sphi 0, %s53
      %s55 = sphi 0, %s53
      %s56 = sphi 0, %s55
      %s70 = sphi 0, %s56
      %s74 = sphi 0, %s74
      %s76 = sphi 0, %s74
      %s77 = sphi 0, %s76
      %s91 = sphi 0, %s77
      %s95 = sphi 0, %s95
      %s97 = sphi 0, %s95
      %s98 = sphi 0, %s97
      %s112 = sphi 0, %s98
      %s116 = sphi 0, %s116
      %s118 = sphi 0, %s116
      %s119 = sphi 0, %s118
      %s133 = sphi 0, %s119
      %s139 = sphi 0, %s141
      %s142 = sphi 0, %s139
      %s143 = sphi 0, %s142
      %s159 = sphi 0, %s143
    $region4: #{cifar10_forward_padded.1} parent=1 // loop_header_branch
      %22 = sbr.rel (%p20) target = $region8
    $region5: #{cifar10_forward_padded.1} parent=1 // loop_body
      %s24 = ssub.s32 %s19, 1
      %s25 = ssub.s32 %s19, 2
      %s26 = sadd.s32 %s19, 1
      %s27 = ssub.s32 %s19, %s26
      %p28 = scmp.eq.s32.totalorder %s27, 0
      %s30 = sadd.s32 %s29, 1
      %s31 = scalar_select %p28, %s29, %s30
      %p34 = pneg %p28
      %p35 = scmp.eq.s32.totalorder %s19, 1
      %p36 = por %p34, %p35
      %p37 = scmp.ne.s32.totalorder %s29, %s32
      %p38 = scmp.eq.s32.totalorder %s19, 0
      %p39 = por %p37, %p38
      %p40 = scmp.ne.s32.totalorder %s29, %s32
      %p41 = scmp.eq.s32.totalorder %s24, 1
      %p42 = por %p40, %p41
      %p43 = scmp.ne.s32.totalorder %s32, %s33
      %p44 = scmp.eq.s32.totalorder %s24, 0
      %p45 = por %p43, %p44
      %p46 = scmp.ne.s32.totalorder %s32, %s33
      %p47 = scmp.eq.s32.totalorder %s25, 1
      %p48 = por %p46, %p47
      %p50 = scmp.ne.s32.totalorder %s33, %s49
      %p51 = scmp.eq.s32.totalorder %s25, 0
      %p52 = por %p50, %p51
      %s54 = sadd.s32 %s53, 1
      %p57 = scmp.eq.s32.totalorder %s19, 1
      %p58 = scmp.ne.s32.totalorder %s53, %s55
      %p59 = scmp.eq.s32.totalorder %s19, 0
      %p60 = por %p58, %p59
      %p61 = scmp.ne.s32.totalorder %s53, %s55
      %p62 = scmp.eq.s32.totalorder %s24, 1
      %p63 = por %p61, %p62
      %p64 = scmp.ne.s32.totalorder %s55, %s56
      %p65 = scmp.eq.s32.totalorder %s24, 0
      %p66 = por %p64, %p65
      %p67 = scmp.ne.s32.totalorder %s55, %s56
      %p68 = scmp.eq.s32.totalorder %s25, 1
      %p69 = por %p67, %p68
      %p71 = scmp.ne.s32.totalorder %s56, %s70
      %p72 = scmp.eq.s32.totalorder %s25, 0
      %p73 = por %p71, %p72
      %s75 = sadd.s32 %s74, 1
      %p78 = scmp.eq.s32.totalorder %s19, 1
      %p79 = scmp.ne.s32.totalorder %s74, %s76
      %p80 = scmp.eq.s32.totalorder %s19, 0
      %p81 = por %p79, %p80
      %p82 = scmp.ne.s32.totalorder %s74, %s76
      %p83 = scmp.eq.s32.totalorder %s24, 1
      %p84 = por %p82, %p83
      %p85 = scmp.ne.s32.totalorder %s76, %s77
      %p86 = scmp.eq.s32.totalorder %s24, 0
      %p87 = por %p85, %p86
      %p88 = scmp.ne.s32.totalorder %s76, %s77
      %p89 = scmp.eq.s32.totalorder %s25, 1
      %p90 = por %p88, %p89
      %p92 = scmp.ne.s32.totalorder %s77, %s91
      %p93 = scmp.eq.s32.totalorder %s25, 0
      %p94 = por %p92, %p93
      %s96 = sadd.s32 %s95, 1
      %p99 = scmp.eq.s32.totalorder %s19, 1
      %p100 = scmp.ne.s32.totalorder %s95, %s97
      %p101 = scmp.eq.s32.totalorder %s19, 0
      %p102 = por %p100, %p101
      %p103 = scmp.ne.s32.totalorder %s95, %s97
      %p104 = scmp.eq.s32.totalorder %s24, 1
      %p105 = por %p103, %p104
      %p106 = scmp.ne.s32.totalorder %s97, %s98
      %p107 = scmp.eq.s32.totalorder %s24, 0
      %p108 = por %p106, %p107
      %p109 = scmp.ne.s32.totalorder %s97, %s98
      %p110 = scmp.eq.s32.totalorder %s25, 1
      %p111 = por %p109, %p110
      %p113 = scmp.ne.s32.totalorder %s98, %s112
      %p114 = scmp.eq.s32.totalorder %s25, 0
      %p115 = por %p113, %p114
      %s117 = sadd.s32 %s116, 1
      %p120 = scmp.eq.s32.totalorder %s19, 1
      %p121 = scmp.ne.s32.totalorder %s116, %s118
      %p122 = scmp.eq.s32.totalorder %s19, 0
      %p123 = por %p121, %p122
      %p124 = scmp.ne.s32.totalorder %s116, %s118
      %p125 = scmp.eq.s32.totalorder %s24, 1
      %p126 = por %p124, %p125
      %p127 = scmp.ne.s32.totalorder %s118, %s119
      %p128 = scmp.eq.s32.totalorder %s24, 0
      %p129 = por %p127, %p128
      %p130 = scmp.ne.s32.totalorder %s118, %s119
      %p131 = scmp.eq.s32.totalorder %s25, 1
      %p132 = por %p130, %p131
      %p134 = scmp.ne.s32.totalorder %s119, %s133
      %p135 = scmp.eq.s32.totalorder %s25, 0
      %p136 = por %p134, %p135
      %s137 = ssub.s32 %s19, %s26
      %p138 = scmp.eq.s32.totalorder %s137, 0
      %s140 = sadd.s32 %s139, 1
      %s141 = scalar_select %p138, %s139, %s140
      %p144 = pneg %p138
      %p145 = scmp.eq.s32.totalorder %s19, 1
      %p146 = por %p144, %p145
      %p147 = scmp.ne.s32.totalorder %s139, %s142
      %p148 = scmp.eq.s32.totalorder %s19, 0
      %p149 = por %p147, %p148
      %p150 = scmp.ne.s32.totalorder %s139, %s142
      %p151 = scmp.eq.s32.totalorder %s24, 1
      %p152 = por %p150, %p151
      %p153 = scmp.ne.s32.totalorder %s142, %s143
      %p154 = scmp.eq.s32.totalorder %s24, 0
      %p155 = por %p153, %p154
      %p156 = scmp.ne.s32.totalorder %s142, %s143
      %p157 = scmp.eq.s32.totalorder %s25, 1
      %p158 = por %p156, %p157
      %p160 = scmp.ne.s32.totalorder %s143, %s159
      %p161 = scmp.eq.s32.totalorder %s25, 0
      %p162 = por %p160, %p161
      %p163 = scmp.le.s32.totalorder 1, %s19
      %p164 = scmp.lt.s32.totalorder %s19, 3
      %p165 = pnand %p163, %p164
      %p166 = pneg %p165
      // Predicated region
      $region9: #{cifar10_forward_padded.1} parent=5 // pred_check
        _
      $region10: #{cifar10_forward_padded.1} parent=5 // pred_check_branch
        %168 = sbr.rel (%p165) target = $region12
      $region11: #{cifar10_forward_padded.1} parent=5 // pred_region
        %s169 = ssub.s32 %s19, 1
        // Predicated region
        $region13: #{cifar10_forward_padded.1} parent=11 // pred_check
          %p170 = pneg %p66
        $region14: #{cifar10_forward_padded.1} parent=11 // pred_check_branch
          %172 = sbr.rel (%p170) target = $region16
        $region15: #{cifar10_forward_padded.1} parent=11 // pred_region
          %s174 = ssub.s32 2048, 2048
          %175 = vsyncadd [#allocation6], %s174
          %s176 = sshll.u32 [#allocation5], 4
          %s177 = int_to_ptr.vmem [resolvable:$true] %s176
          %182 = dma.hbm_to_vmem [thread:$0]  %s1, 2048, %s177, [#allocation6], 128, 128, 8
        $region16: #{cifar10_forward_padded.1} parent=11 // pred_fallthru
          _
        // Predicated region
        $region17: #{cifar10_forward_padded.1} parent=11 // pred_check
          %p183 = pneg %p87
        $region18: #{cifar10_forward_padded.1} parent=11 // pred_check_branch
          %185 = sbr.rel (%p183) target = $region20
        $region19: #{cifar10_forward_padded.1} parent=11 // pred_region
          %s187 = ssub.s32 2048, 2048
          %188 = vsyncadd [#allocation6], %s187
          %s189 = sshll.u32 [#allocation7], 4
          %s190 = int_to_ptr.vmem [resolvable:$true] %s189
          %195 = dma.hbm_to_vmem [thread:$0]  %s2, 2048, %s190, [#allocation6], 64, 64, 4
        $region20: #{cifar10_forward_padded.1} parent=11 // pred_fallthru
          _
        // Predicated region
        $region21: #{cifar10_forward_padded.1} parent=11 // pred_check
          %p196 = pneg %p108
        $region22: #{cifar10_forward_padded.1} parent=11 // pred_check_branch
          %198 = sbr.rel (%p196) target = $region24
        $region23: #{cifar10_forward_padded.1} parent=11 // pred_region
          %s200 = ssub.s32 1024, 1024
          %201 = vsyncadd [#allocation9], %s200
          %s202 = sshll.u32 [#allocation8], 4
          %s203 = int_to_ptr.vmem [resolvable:$true] %s202
          %208 = dma.hbm_to_vmem [thread:$0]  %s3, 1024, %s203, [#allocation9], 64, 64, 4
        $region24: #{cifar10_forward_padded.1} parent=11 // pred_fallthru
          _
        // Predicated region
        $region25: #{cifar10_forward_padded.1} parent=11 // pred_check
          %p209 = pneg %p129
        $region26: #{cifar10_forward_padded.1} parent=11 // pred_check_branch
          %211 = sbr.rel (%p209) target = $region28
        $region27: #{cifar10_forward_padded.1} parent=11 // pred_region
          _
        $region28: #{cifar10_forward_padded.1} parent=11 // pred_fallthru
          _
      $region12: #{cifar10_forward_padded.1} parent=5 // pred_fallthru
        _
      %p212 = scmp.lt.s32.totalorder %s19, 2
      // Predicated region
      $region29: #{cifar10_forward_padded.1} parent=5 // pred_check
        %p213 = pneg %p212
      $region30: #{cifar10_forward_padded.1} parent=5 // pred_check_branch
        %215 = sbr.rel (%p213) target = $region32
      $region31: #{cifar10_forward_padded.1} parent=5 // pred_region
        // Predicated region
        $region33: #{cifar10_forward_padded.1} parent=31 // pred_check
          %p216 = pneg %p39
        $region34: #{cifar10_forward_padded.1} parent=31 // pred_check_branch
          %218 = sbr.rel (%p216) target = $region36
        $region35: #{cifar10_forward_padded.1} parent=31 // pred_region
          %s219 = sand.u32 %s29, 1
          %s220 = scalar_lea.sflag [#allocation3], %s219
          %s221 = sand.u32 %s29, 1
          %s222 = smul.addr %s221, 256
          %s223 = scalar_lea.vmem [#allocation2], %s222
          %s224 = smul.u32 32, %s19
          %s225 = ssub.s32 38, %s224
          %p226 = scmp.lt.s32.totalorder %s225, 32
          %s227 = scalar_select %p226, %s225, 32
          %s228 = smul.u32 128, %s227
          %s230 = ssub.s32 4096, %s228
          %231 = vsyncadd %s220, %s230
          %p232 = scmp.ne.s32.totalorder 0, %s228
          %s233 = smul.addr %s224, 128
          %s234 = scalar_lea.hbm %s0, %s233
          %s235 = smul.u32 8, %s227
          %s236 = sshll.u32 %s223, 4
          %s237 = int_to_ptr.vmem [resolvable:$true] %s236
          %s238 = sshll.u32 %s235, 4
          %242 = dma.hbm_to_vmem [thread:$0]  (%p232), %s234, %s238, %s237, %s220, 128, 128, 8
        $region36: #{cifar10_forward_padded.1} parent=31 // pred_fallthru
          _
      $region32: #{cifar10_forward_padded.1} parent=5 // pred_fallthru
        _
      %p243 = scmp.le.s32.totalorder 1, %s19
      %p244 = scmp.lt.s32.totalorder %s19, 3
      %p245 = pnand %p243, %p244
      %p246 = pneg %p245
      // Predicated region
      $region37: #{cifar10_forward_padded.1} parent=5 // pred_check
        _
      $region38: #{cifar10_forward_padded.1} parent=5 // pred_check_branch
        %248 = sbr.rel (%p245) target = $region40
      $region39: #{cifar10_forward_padded.1} parent=5 // pred_region
        %s249 = ssub.s32 %s19, 1
        %s250 = sand.u32 %s32, 1
        %s251 = scalar_lea.sflag [#allocation3], %s250
        %s252 = sand.u32 %s32, 1
        %s253 = smul.addr %s252, 256
        %s254 = scalar_lea.vmem [#allocation2], %s253
        // Predicated region
        $region41: #{cifar10_forward_padded.1} parent=39 // pred_check
          %p255 = pneg %p45
        $region42: #{cifar10_forward_padded.1} parent=39 // pred_check_branch
          %257 = sbr.rel (%p255) target = $region44
        $region43: #{cifar10_forward_padded.1} parent=39 // pred_region
          %258 = dma.done %s251, 4096
        $region44: #{cifar10_forward_padded.1} parent=39 // pred_fallthru
          _
        // Predicated region
        $region45: #{cifar10_forward_padded.1} parent=39 // pred_check
          %p259 = pneg %p66
        $region46: #{cifar10_forward_padded.1} parent=39 // pred_check_branch
          %261 = sbr.rel (%p259) target = $region48
        $region47: #{cifar10_forward_padded.1} parent=39 // pred_region
          %262 = dma.done [#allocation6], 2048
        $region48: #{cifar10_forward_padded.1} parent=39 // pred_fallthru
          _
        // Predicated region
        $region49: #{cifar10_forward_padded.1} parent=39 // pred_check
          %p263 = pneg %p87
        $region50: #{cifar10_forward_padded.1} parent=39 // pred_check_branch
          %265 = sbr.rel (%p263) target = $region52
        $region51: #{cifar10_forward_padded.1} parent=39 // pred_region
          %266 = dma.done [#allocation6], 2048
        $region52: #{cifar10_forward_padded.1} parent=39 // pred_fallthru
          _
        // Predicated region
        $region53: #{cifar10_forward_padded.1} parent=39 // pred_check
          %p267 = pneg %p108
        $region54: #{cifar10_forward_padded.1} parent=39 // pred_check_branch
          %269 = sbr.rel (%p267) target = $region56
        $region55: #{cifar10_forward_padded.1} parent=39 // pred_region
          %270 = dma.done [#allocation9], 1024
        $region56: #{cifar10_forward_padded.1} parent=39 // pred_fallthru
          _
        %s271 = sand.u32 %s32, 1
        %s272 = scalar_lea.sflag [#allocation3], %s271
        %s273 = sand.u32 %s32, 1
        %s274 = smul.addr %s273, 256
        %s275 = scalar_lea.vmem [#allocation2], %s274
        %p276 = pneg %p45
        %p277 = pneg %p42
        %p278 = pneg %p66
        %p279 = pneg %p63
        %p280 = pneg %p87
        %p281 = pneg %p84
        %p282 = pneg %p108
        %p283 = pneg %p105
        %p284 = pneg %p129
        %p285 = pneg %p126
        %p286 = pneg %p155
        %p287 = pneg %p152
        %s288 = sand.u32 %s142, 1
        %s289 = scalar_lea.sflag [#allocation4], %s288
        %s290 = sand.u32 %s142, 1
        %s291 = smul.addr %s290, 128
        %s292 = scalar_lea.vmem [#allocation10], %s291
        %s293 = smul.u32 32, %s24
        %s294 = ssub.s32 38, %s293
        %p295 = scmp.lt.s32.totalorder %s294, 32
        %s296 = scalar_select %p295, %s294, 32
        %s297 = smul.u32 128, %s296
        %s298 = smul.u32 32, %s24
        %s299 = ssub.s32 38, %s298
        %p300 = scmp.lt.s32.totalorder %s299, 32
        %s301 = scalar_select %p300, %s299, 32
        %s302 = smul.u32 64, %s301
        %v304 = vld [vmem:[%s254] sm:$0xff]
        %v305 = vld [vmem:[%s254 + $0x8] sm:$0xff]
        %v306 = vld [vmem:[%s254 + $0x10] sm:$0xff]
        %v307 = vld [vmem:[%s254 + $0x18] sm:$0xff]
        %v308 = vld [vmem:[%s254 + $0x20] sm:$0xff]
        %v309 = vld [vmem:[%s254 + $0x28] sm:$0xff]
        %v310 = vld [vmem:[%s254 + $0x30] sm:$0xff]
        %v311 = vld [vmem:[%s254 + $0x38] sm:$0xff]
        %v312 = vld [vmem:[%s254 + $0x40] sm:$0xff]
        %v313 = vld [vmem:[%s254 + $0x48] sm:$0xff]
        %v314 = vld [vmem:[%s254 + $0x50] sm:$0xff]
        %v315 = vld [vmem:[%s254 + $0x58] sm:$0xff]
        %v316 = vld [vmem:[%s254 + $0x60] sm:$0xff]
        %v317 = vld [vmem:[%s254 + $0x68] sm:$0xff]
        %v318 = vld [vmem:[%s254 + $0x70] sm:$0xff]
        %v319 = vld [vmem:[%s254 + $0x78] sm:$0xff]
        %v320 = vld [vmem:[%s254 + $0x80] sm:$0xff]
        %v321 = vld [vmem:[%s254 + $0x88] sm:$0xff]
        %v322 = vld [vmem:[%s254 + $0x90] sm:$0xff]
        %v323 = vld [vmem:[%s254 + $0x98] sm:$0xff]
        %v324 = vld [vmem:[%s254 + $0xa0] sm:$0xff]
        %v325 = vld [vmem:[%s254 + $0xa8] sm:$0xff]
        %v326 = vld [vmem:[%s254 + $0xb0] sm:$0xff]
        %v327 = vld [vmem:[%s254 + $0xb8] sm:$0xff]
        %v328 = vld [vmem:[%s254 + $0xc0] sm:$0xff]
        %v329 = vld [vmem:[%s254 + $0xc8] sm:$0xff]
        %v330 = vld [vmem:[%s254 + $0xd0] sm:$0xff]
        %v331 = vld [vmem:[%s254 + $0xd8] sm:$0xff]
        %v332 = vld [vmem:[%s254 + $0xe0] sm:$0xff]
        %v333 = vld [vmem:[%s254 + $0xe8] sm:$0xff]
        %v334 = vld [vmem:[%s254 + $0xf0] sm:$0xff]
        %v335 = vld [vmem:[%s254 + $0xf8] sm:$0xff]
        %v336 = vpack.c.bf16 %v305, %v304
        %v337 = vpack.c.bf16 %v307, %v306
        %v338 = vpack.c.bf16 %v309, %v308
        %v339 = vpack.c.bf16 %v311, %v310
        %v340 = vpack.c.bf16 %v313, %v312
        %v341 = vpack.c.bf16 %v315, %v314
        %v342 = vpack.c.bf16 %v317, %v316
        %v343 = vpack.c.bf16 %v319, %v318
        %v344 = vpack.c.bf16 %v321, %v320
        %v345 = vpack.c.bf16 %v323, %v322
        %v346 = vpack.c.bf16 %v325, %v324
        %v347 = vpack.c.bf16 %v327, %v326
        %v348 = vpack.c.bf16 %v329, %v328
        %v349 = vpack.c.bf16 %v331, %v330
        %v350 = vpack.c.bf16 %v333, %v332
        %v351 = vpack.c.bf16 %v335, %v334
        %v352 = vld [vmem:[#allocation5] sm:$0xff]
        %v353 = vld [vmem:[#allocation5 + $0x8] sm:$0xff]
        %v354 = vld [vmem:[#allocation5 + $0x10] sm:$0xff]
        %v355 = vld [vmem:[#allocation5 + $0x18] sm:$0xff]
        %v356 = vld [vmem:[#allocation5 + $0x20] sm:$0xff]
        %v357 = vld [vmem:[#allocation5 + $0x28] sm:$0xff]
        %v358 = vld [vmem:[#allocation5 + $0x30] sm:$0xff]
        %v359 = vld [vmem:[#allocation5 + $0x38] sm:$0xff]
        %v360 = vld [vmem:[#allocation5 + $0x40] sm:$0xff]
        %v361 = vld [vmem:[#allocation5 + $0x48] sm:$0xff]
        %v362 = vld [vmem:[#allocation5 + $0x50] sm:$0xff]
        %v363 = vld [vmem:[#allocation5 + $0x58] sm:$0xff]
        %v364 = vld [vmem:[#allocation5 + $0x60] sm:$0xff]
        %v365 = vld [vmem:[#allocation5 + $0x68] sm:$0xff]
        %v366 = vld [vmem:[#allocation5 + $0x70] sm:$0xff]
        %v367 = vld [vmem:[#allocation5 + $0x78] sm:$0xff]
        %v368 = vld [vmem:[%s4] sm:$0x3]
        %v370 = vlaneseq
        %v371 = vshrl.u32 %v370, 7
        %v372 = vsub.s32 0, %v371
        %v373 = vrot.slane %v368, %v372
        %v374 = vlaneseq
        %v375 = vshrl.u32 %v374, 7
        %v376 = vsub.s32 1, %v375
        %v377 = vrot.slane %v368, %v376
        %v396 = vunpack.c.l.b16 %v352
        %v397 = vunpack.c.h.b16 %v352
        %v398 = vunpack.c.l.b16 %v353
        %v399 = vunpack.c.h.b16 %v353
        %v400 = vunpack.c.l.b16 %v354
        %v401 = vunpack.c.h.b16 %v354
        %v402 = vunpack.c.l.b16 %v355
        %v403 = vunpack.c.h.b16 %v355
        %v404 = vunpack.c.l.b16 %v356
        %v405 = vunpack.c.h.b16 %v356
        %v406 = vunpack.c.l.b16 %v357
        %v407 = vunpack.c.h.b16 %v357
        %v408 = vunpack.c.l.b16 %v358
        %v409 = vunpack.c.h.b16 %v358
        %v410 = vunpack.c.l.b16 %v359
        %v411 = vunpack.c.h.b16 %v359
        %v412 = vunpack.c.l.b16 %v360
        %v413 = vunpack.c.h.b16 %v360
        %v414 = vunpack.c.l.b16 %v361
        %v415 = vunpack.c.h.b16 %v361
        %v416 = vunpack.c.l.b16 %v362
        %v417 = vunpack.c.h.b16 %v362
        %v418 = vunpack.c.l.b16 %v363
        %v419 = vunpack.c.h.b16 %v363
        %v420 = vunpack.c.l.b16 %v364
        %v421 = vunpack.c.h.b16 %v364
        %v422 = vunpack.c.l.b16 %v365
        %v423 = vunpack.c.h.b16 %v365
        %v424 = vunpack.c.l.b16 %v366
        %v425 = vunpack.c.h.b16 %v366
        %v426 = vunpack.c.l.b16 %v367
        %v427 = vunpack.c.h.b16 %v367
        %v428 = vpack.c.b16 %v398, %v396
        %v429 = vpack.c.b16 %v399, %v397
        %v430 = vpack.c.b16 %v402, %v400
        %v431 = vpack.c.b16 %v403, %v401
        %v432 = vpack.c.b16 %v406, %v404
        %v433 = vpack.c.b16 %v407, %v405
        %v434 = vpack.c.b16 %v410, %v408
        %v435 = vpack.c.b16 %v411, %v409
        %v436 = vpack.c.b16 %v414, %v412
        %v437 = vpack.c.b16 %v415, %v413
        %v438 = vpack.c.b16 %v418, %v416
        %v439 = vpack.c.b16 %v419, %v417
        %v440 = vpack.c.b16 %v422, %v420
        %v441 = vpack.c.b16 %v423, %v421
        %v442 = vpack.c.b16 %v426, %v424
        %v443 = vpack.c.b16 %v427, %v425
        %460 = vmatprep.subr.bf16.mxu0 %v429
        %461 = vmatpush1.bf16.msra.mxu0 %v428
        %462 = vmatprep.subr.bf16.mxu0 %v431
        %463 = vmatpush1.bf16.msra.mxu0 %v430
        %464 = vmatprep.subr.bf16.mxu0 %v433
        %465 = vmatpush1.bf16.msra.mxu0 %v432
        %466 = vmatprep.subr.bf16.mxu0 %v435
        %467 = vmatpush1.bf16.msra.mxu0 %v434
        %468 = vmatprep.subr.bf16.mxu0 %v437
        %469 = vmatpush1.bf16.msra.mxu0 %v436
        %470 = vmatprep.subr.bf16.mxu0 %v439
        %471 = vmatpush1.bf16.msra.mxu0 %v438
        %472 = vmatprep.subr.bf16.mxu0 %v441
        %473 = vmatpush1.bf16.msra.mxu0 %v440
        %474 = vmatprep.subr.bf16.mxu0 %v443
        %475 = vmatpush1.bf16.msra.mxu0 %v442
        %476 = vmatprep.subr.bf16.mxu0 0
        %477 = vmatpush1.bf16.msra.mxu0 0
        %478 = vmatprep.subr.bf16.mxu0 0
        %479 = vmatpush1.bf16.msra.mxu0 0
        %480 = vmatprep.subr.bf16.mxu0 0
        %481 = vmatpush1.bf16.msra.mxu0 0
        %482 = vmatprep.subr.bf16.mxu0 0
        %483 = vmatpush1.bf16.msra.mxu0 0
        %484 = vmatprep.subr.bf16.mxu0 0
        %485 = vmatpush1.bf16.msra.mxu0 0
        %486 = vmatprep.subr.bf16.mxu0 0
        %487 = vmatpush1.bf16.msra.mxu0 0
        %488 = vmatprep.subr.bf16.mxu0 0
        %489 = vmatpush1.bf16.msra.mxu0 0
        %490 = vmatprep.subr.bf16.mxu0 0
        %491 = vmatpush1.bf16.msra.mxu0 0
        %492 = vmatprep.mubr.bf16.mxu0 0
        %493 = vmatmul.mubr.bf16.gmra.mrb[0].mxu0 %v336
        %v494 = vpop.f32.mrb[0].mxu0
        %v495 = vadd.f32 %v373, %v494
        %v496 = vpop.f32.mrb[0].mxu0
        %v497 = vadd.f32 %v377, %v496
        %v498 = vpop.f32.mrb[0].mxu0
        %v499 = vadd.f32 %v373, %v498
        %v500 = vpop.f32.mrb[0].mxu0
        %v501 = vadd.f32 %v377, %v500
        %502 = vmatprep.mubr.bf16.mxu0 0
        %503 = vmatmul.mubr.bf16.gmra.mrb[0].mxu0 %v337
        %v504 = vpop.f32.mrb[0].mxu0
        %v505 = vadd.f32 %v373, %v504
        %v506 = vpop.f32.mrb[0].mxu0
        %v507 = vadd.f32 %v377, %v506
        %v508 = vpop.f32.mrb[0].mxu0
        %v509 = vadd.f32 %v373, %v508
        %v510 = vpop.f32.mrb[0].mxu0
        %v511 = vadd.f32 %v377, %v510
        %512 = vmatprep.mubr.bf16.mxu0 0
        %513 = vmatmul.mubr.bf16.gmra.mrb[0].mxu0 %v338
        %v514 = vpop.f32.mrb[0].mxu0
        %v515 = vadd.f32 %v373, %v514
        %v516 = vpop.f32.mrb[0].mxu0
        %v517 = vadd.f32 %v377, %v516
        %v518 = vpop.f32.mrb[0].mxu0
        %v519 = vadd.f32 %v373, %v518
        %v520 = vpop.f32.mrb[0].mxu0
        %v521 = vadd.f32 %v377, %v520
        %522 = vmatprep.mubr.bf16.mxu0 0
        %523 = vmatmul.mubr.bf16.gmra.mrb[0].mxu0 %v339
        %v524 = vpop.f32.mrb[0].mxu0
        %v525 = vadd.f32 %v373, %v524
        %v526 = vpop.f32.mrb[0].mxu0
        %v527 = vadd.f32 %v377, %v526
        %v528 = vpop.f32.mrb[0].mxu0
        %v529 = vadd.f32 %v373, %v528
        %v530 = vpop.f32.mrb[0].mxu0
        %v531 = vadd.f32 %v377, %v530
        %532 = vmatprep.mubr.bf16.mxu0 0
        %533 = vmatmul.mubr.bf16.gmra.mrb[0].mxu0 %v340
        %v534 = vpop.f32.mrb[0].mxu0
        %v535 = vadd.f32 %v373, %v534
        %v536 = vpop.f32.mrb[0].mxu0
        %v537 = vadd.f32 %v377, %v536
        %v538 = vpop.f32.mrb[0].mxu0
        %v539 = vadd.f32 %v373, %v538
        %v540 = vpop.f32.mrb[0].mxu0
        %v541 = vadd.f32 %v377, %v540
        %542 = vmatprep.mubr.bf16.mxu0 0
        %543 = vmatmul.mubr.bf16.gmra.mrb[0].mxu0 %v341
        %v544 = vpop.f32.mrb[0].mxu0
        %v545 = vadd.f32 %v373, %v544
        %v546 = vpop.f32.mrb[0].mxu0
        %v547 = vadd.f32 %v377, %v546
        %v548 = vpop.f32.mrb[0].mxu0
        %v549 = vadd.f32 %v373, %v548
        %v550 = vpop.f32.mrb[0].mxu0
        %v551 = vadd.f32 %v377, %v550
        %552 = vmatprep.mubr.bf16.mxu0 0
        %553 = vmatmul.mubr.bf16.gmra.mrb[0].mxu0 %v342
        %v554 = vpop.f32.mrb[0].mxu0
        %v555 = vadd.f32 %v373, %v554
        %v556 = vpop.f32.mrb[0].mxu0
        %v557 = vadd.f32 %v377, %v556
        %v558 = vpop.f32.mrb[0].mxu0
        %v559 = vadd.f32 %v373, %v558
        %v560 = vpop.f32.mrb[0].mxu0
        %v561 = vadd.f32 %v377, %v560
        %562 = vmatprep.mubr.bf16.mxu0 0
        %563 = vmatmul.mubr.bf16.gmra.mrb[0].mxu0 %v343
        %v564 = vpop.f32.mrb[0].mxu0
        %v565 = vadd.f32 %v373, %v564
        %v566 = vpop.f32.mrb[0].mxu0
        %v567 = vadd.f32 %v377, %v566
        %v568 = vpop.f32.mrb[0].mxu0
        %v569 = vadd.f32 %v373, %v568
        %v570 = vpop.f32.mrb[0].mxu0
        %v571 = vadd.f32 %v377, %v570
        %572 = vmatprep.mubr.bf16.mxu0 0
        %573 = vmatmul.mubr.bf16.gmra.mrb[0].mxu0 %v344
        %v574 = vpop.f32.mrb[0].mxu0
        %v575 = vadd.f32 %v373, %v574
        %v576 = vpop.f32.mrb[0].mxu0
        %v577 = vadd.f32 %v377, %v576
        %v578 = vpop.f32.mrb[0].mxu0
        %v579 = vadd.f32 %v373, %v578
        %v580 = vpop.f32.mrb[0].mxu0
        %v581 = vadd.f32 %v377, %v580
        %582 = vmatprep.mubr.bf16.mxu0 0
        %583 = vmatmul.mubr.bf16.gmra.mrb[0].mxu0 %v345
        %v584 = vpop.f32.mrb[0].mxu0
        %v585 = vadd.f32 %v373, %v584
        %v586 = vpop.f32.mrb[0].mxu0
        %v587 = vadd.f32 %v377, %v586
        %v588 = vpop.f32.mrb[0].mxu0
        %v589 = vadd.f32 %v373, %v588
        %v590 = vpop.f32.mrb[0].mxu0
        %v591 = vadd.f32 %v377, %v590
        %592 = vmatprep.mubr.bf16.mxu0 0
        %593 = vmatmul.mubr.bf16.gmra.mrb[0].mxu0 %v346
        %v594 = vpop.f32.mrb[0].mxu0
        %v595 = vadd.f32 %v373, %v594
        %v596 = vpop.f32.mrb[0].mxu0
        %v597 = vadd.f32 %v377, %v596
        %v598 = vpop.f32.mrb[0].mxu0
        %v599 = vadd.f32 %v373, %v598
        %v600 = vpop.f32.mrb[0].mxu0
        %v601 = vadd.f32 %v377, %v600
        %602 = vmatprep.mubr.bf16.mxu0 0
        %603 = vmatmul.mubr.bf16.gmra.mrb[0].mxu0 %v347
        %v604 = vpop.f32.mrb[0].mxu0
        %v605 = vadd.f32 %v373, %v604
        %v606 = vpop.f32.mrb[0].mxu0
        %v607 = vadd.f32 %v377, %v606
        %v608 = vpop.f32.mrb[0].mxu0
        %v609 = vadd.f32 %v373, %v608
        %v610 = vpop.f32.mrb[0].mxu0
        %v611 = vadd.f32 %v377, %v610
        %612 = vmatprep.mubr.bf16.mxu0 0
        %613 = vmatmul.mubr.bf16.gmra.mrb[0].mxu0 %v348
        %v614 = vpop.f32.mrb[0].mxu0
        %v615 = vadd.f32 %v373, %v614
        %v616 = vpop.f32.mrb[0].mxu0
        %v617 = vadd.f32 %v377, %v616
        %v618 = vpop.f32.mrb[0].mxu0
        %v619 = vadd.f32 %v373, %v618
        %v620 = vpop.f32.mrb[0].mxu0
        %v621 = vadd.f32 %v377, %v620
        %622 = vmatprep.mubr.bf16.mxu0 0
        %623 = vmatmul.mubr.bf16.gmra.mrb[0].mxu0 %v349
        %v624 = vpop.f32.mrb[0].mxu0
        %v625 = vadd.f32 %v373, %v624
        %v626 = vpop.f32.mrb[0].mxu0
        %v627 = vadd.f32 %v377, %v626
        %v628 = vpop.f32.mrb[0].mxu0
        %v629 = vadd.f32 %v373, %v628
        %v630 = vpop.f32.mrb[0].mxu0
        %v631 = vadd.f32 %v377, %v630
        %632 = vmatprep.mubr.bf16.mxu0 0
        %633 = vmatmul.mubr.bf16.gmra.mrb[0].mxu0 %v350
        %v634 = vpop.f32.mrb[0].mxu0
        %v635 = vadd.f32 %v373, %v634
        %v636 = vpop.f32.mrb[0].mxu0
        %v637 = vadd.f32 %v377, %v636
        %v638 = vpop.f32.mrb[0].mxu0
        %v639 = vadd.f32 %v373, %v638
        %v640 = vpop.f32.mrb[0].mxu0
        %v641 = vadd.f32 %v377, %v640
        %642 = vmatprep.mubr.bf16.mxu0 0
        %643 = vmatmul.mubr.bf16.gmra.mrb[0].mxu0 %v351
        %v644 = vpop.f32.mrb[0].mxu0
        %v645 = vadd.f32 %v373, %v644
        %v646 = vpop.f32.mrb[0].mxu0
        %v647 = vadd.f32 %v377, %v646
        %v648 = vpop.f32.mrb[0].mxu0
        %v649 = vadd.f32 %v373, %v648
        %v650 = vpop.f32.mrb[0].mxu0
        %v651 = vadd.f32 %v377, %v650
        %652 = vdwg.mxu0
        %v653 = vmax.f32 %v495, 0.0
        %v654 = vmax.f32 %v497, 0.0
        %v655 = vmax.f32 %v499, 0.0
        %v656 = vmax.f32 %v501, 0.0
        %v657 = vmax.f32 %v505, 0.0
        %v658 = vmax.f32 %v507, 0.0
        %v659 = vmax.f32 %v509, 0.0
        %v660 = vmax.f32 %v511, 0.0
        %v661 = vmax.f32 %v515, 0.0
        %v662 = vmax.f32 %v517, 0.0
        %v663 = vmax.f32 %v519, 0.0
        %v664 = vmax.f32 %v521, 0.0
        %v665 = vmax.f32 %v525, 0.0
        %v666 = vmax.f32 %v527, 0.0
        %v667 = vmax.f32 %v529, 0.0
        %v668 = vmax.f32 %v531, 0.0
        %v669 = vmax.f32 %v535, 0.0
        %v670 = vmax.f32 %v537, 0.0
        %v671 = vmax.f32 %v539, 0.0
        %v672 = vmax.f32 %v541, 0.0
        %v673 = vmax.f32 %v545, 0.0
        %v674 = vmax.f32 %v547, 0.0
        %v675 = vmax.f32 %v549, 0.0
        %v676 = vmax.f32 %v551, 0.0
        %v677 = vmax.f32 %v555, 0.0
        %v678 = vmax.f32 %v557, 0.0
        %v679 = vmax.f32 %v559, 0.0
        %v680 = vmax.f32 %v561, 0.0
        %v681 = vmax.f32 %v565, 0.0
        %v682 = vmax.f32 %v567, 0.0
        %v683 = vmax.f32 %v569, 0.0
        %v684 = vmax.f32 %v571, 0.0
        %v685 = vmax.f32 %v575, 0.0
        %v686 = vmax.f32 %v577, 0.0
        %v687 = vmax.f32 %v579, 0.0
        %v688 = vmax.f32 %v581, 0.0
        %v689 = vmax.f32 %v585, 0.0
        %v690 = vmax.f32 %v587, 0.0
        %v691 = vmax.f32 %v589, 0.0
        %v692 = vmax.f32 %v591, 0.0
        %v693 = vmax.f32 %v595, 0.0
        %v694 = vmax.f32 %v597, 0.0
        %v695 = vmax.f32 %v599, 0.0
        %v696 = vmax.f32 %v601, 0.0
        %v697 = vmax.f32 %v605, 0.0
        %v698 = vmax.f32 %v607, 0.0
        %v699 = vmax.f32 %v609, 0.0
        %v700 = vmax.f32 %v611, 0.0
        %v701 = vmax.f32 %v615, 0.0
        %v702 = vmax.f32 %v617, 0.0
        %v703 = vmax.f32 %v619, 0.0
        %v704 = vmax.f32 %v621, 0.0
        %v705 = vmax.f32 %v625, 0.0
        %v706 = vmax.f32 %v627, 0.0
        %v707 = vmax.f32 %v629, 0.0
        %v708 = vmax.f32 %v631, 0.0
        %v709 = vmax.f32 %v635, 0.0
        %v710 = vmax.f32 %v637, 0.0
        %v711 = vmax.f32 %v639, 0.0
        %v712 = vmax.f32 %v641, 0.0
        %v713 = vmax.f32 %v645, 0.0
        %v714 = vmax.f32 %v647, 0.0
        %v715 = vmax.f32 %v649, 0.0
        %v716 = vmax.f32 %v651, 0.0
        %v717 = vpack.c.bf16 %v655, %v653
        %v718 = vpack.c.bf16 %v656, %v654
        %v719 = vpack.c.bf16 %v659, %v657
        %v720 = vpack.c.bf16 %v660, %v658
        %v721 = vpack.c.bf16 %v663, %v661
        %v722 = vpack.c.bf16 %v664, %v662
        %v723 = vpack.c.bf16 %v667, %v665
        %v724 = vpack.c.bf16 %v668, %v666
        %v725 = vpack.c.bf16 %v671, %v669
        %v726 = vpack.c.bf16 %v672, %v670
        %v727 = vpack.c.bf16 %v675, %v673
        %v728 = vpack.c.bf16 %v676, %v674
        %v729 = vpack.c.bf16 %v679, %v677
        %v730 = vpack.c.bf16 %v680, %v678
        %v731 = vpack.c.bf16 %v683, %v681
        %v732 = vpack.c.bf16 %v684, %v682
        %v733 = vpack.c.bf16 %v687, %v685
        %v734 = vpack.c.bf16 %v688, %v686
        %v735 = vpack.c.bf16 %v691, %v689
        %v736 = vpack.c.bf16 %v692, %v690
        %v737 = vpack.c.bf16 %v695, %v693
        %v738 = vpack.c.bf16 %v696, %v694
        %v739 = vpack.c.bf16 %v699, %v697
        %v740 = vpack.c.bf16 %v700, %v698
        %v741 = vpack.c.bf16 %v703, %v701
        %v742 = vpack.c.bf16 %v704, %v702
        %v743 = vpack.c.bf16 %v707, %v705
        %v744 = vpack.c.bf16 %v708, %v706
        %v745 = vpack.c.bf16 %v711, %v709
        %v746 = vpack.c.bf16 %v712, %v710
        %v747 = vpack.c.bf16 %v715, %v713
        %v748 = vpack.c.bf16 %v716, %v714
        %v749 = vld [vmem:[#allocation7] sm:$0xf]
        %v750 = vld [vmem:[#allocation7 + $0x4] sm:$0xf]
        %v751 = vld [vmem:[#allocation7 + $0x8] sm:$0xf]
        %v752 = vld [vmem:[#allocation7 + $0xc] sm:$0xf]
        %v753 = vld [vmem:[#allocation7 + $0x10] sm:$0xf]
        %v754 = vld [vmem:[#allocation7 + $0x14] sm:$0xf]
        %v755 = vld [vmem:[#allocation7 + $0x18] sm:$0xf]
        %v756 = vld [vmem:[#allocation7 + $0x1c] sm:$0xf]
        %v757 = vld [vmem:[#allocation7 + $0x20] sm:$0xf]
        %v758 = vld [vmem:[#allocation7 + $0x24] sm:$0xf]
        %v759 = vld [vmem:[#allocation7 + $0x28] sm:$0xf]
        %v760 = vld [vmem:[#allocation7 + $0x2c] sm:$0xf]
        %v761 = vld [vmem:[#allocation7 + $0x30] sm:$0xf]
        %v762 = vld [vmem:[#allocation7 + $0x34] sm:$0xf]
        %v763 = vld [vmem:[#allocation7 + $0x38] sm:$0xf]
        %v764 = vld [vmem:[#allocation7 + $0x3c] sm:$0xf]
        %v765 = vld [vmem:[#allocation7 + $0x40] sm:$0xf]
        %v766 = vld [vmem:[#allocation7 + $0x44] sm:$0xf]
        %v767 = vld [vmem:[#allocation7 + $0x48] sm:$0xf]
        %v768 = vld [vmem:[#allocation7 + $0x4c] sm:$0xf]
        %v769 = vld [vmem:[#allocation7 + $0x50] sm:$0xf]
        %v770 = vld [vmem:[#allocation7 + $0x54] sm:$0xf]
        %v771 = vld [vmem:[#allocation7 + $0x58] sm:$0xf]
        %v772 = vld [vmem:[#allocation7 + $0x5c] sm:$0xf]
        %v773 = vld [vmem:[#allocation7 + $0x60] sm:$0xf]
        %v774 = vld [vmem:[#allocation7 + $0x64] sm:$0xf]
        %v775 = vld [vmem:[#allocation7 + $0x68] sm:$0xf]
        %v776 = vld [vmem:[#allocation7 + $0x6c] sm:$0xf]
        %v777 = vld [vmem:[#allocation7 + $0x70] sm:$0xf]
        %v778 = vld [vmem:[#allocation7 + $0x74] sm:$0xf]
        %v779 = vld [vmem:[#allocation7 + $0x78] sm:$0xf]
        %v780 = vld [vmem:[#allocation7 + $0x7c] sm:$0xf]
        %v781 = vld [vmem:[%s4 + $0x2] sm:$0x1]
        %v783 = vlaneseq
        %v784 = vshrl.u32 %v783, 7
        %v785 = vsub.s32 0, %v784
        %v786 = vrot.slane %v781, %v785
        %v820 = vunpack.c.l.b16 %v749
        %v821 = vunpack.c.l.b16 %v750
        %v822 = vunpack.c.l.b16 %v751
        %v823 = vunpack.c.l.b16 %v752
        %v824 = vunpack.c.l.b16 %v753
        %v825 = vunpack.c.l.b16 %v754
        %v826 = vunpack.c.l.b16 %v755
        %v827 = vunpack.c.l.b16 %v756
        %v828 = vunpack.c.l.b16 %v757
        %v829 = vunpack.c.l.b16 %v758
        %v830 = vunpack.c.l.b16 %v759
        %v831 = vunpack.c.l.b16 %v760
        %v832 = vunpack.c.l.b16 %v761
        %v833 = vunpack.c.l.b16 %v762
        %v834 = vunpack.c.l.b16 %v763
        %v835 = vunpack.c.l.b16 %v764
        %v836 = vunpack.c.l.b16 %v765
        %v837 = vunpack.c.l.b16 %v766
        %v838 = vunpack.c.l.b16 %v767
        %v839 = vunpack.c.l.b16 %v768
        %v840 = vunpack.c.l.b16 %v769
        %v841 = vunpack.c.l.b16 %v770
        %v842 = vunpack.c.l.b16 %v771
        %v843 = vunpack.c.l.b16 %v772
        %v844 = vunpack.c.l.b16 %v773
        %v845 = vunpack.c.l.b16 %v774
        %v846 = vunpack.c.l.b16 %v775
        %v847 = vunpack.c.l.b16 %v776
        %v848 = vunpack.c.l.b16 %v777
        %v849 = vunpack.c.l.b16 %v778
        %v850 = vunpack.c.l.b16 %v779
        %v851 = vunpack.c.l.b16 %v780
        %v852 = vpack.c.b16 %v821, %v820
        %v853 = vpack.c.b16 %v823, %v822
        %v854 = vpack.c.b16 %v825, %v824
        %v855 = vpack.c.b16 %v827, %v826
        %v856 = vpack.c.b16 %v829, %v828
        %v857 = vpack.c.b16 %v831, %v830
        %v858 = vpack.c.b16 %v833, %v832
        %v859 = vpack.c.b16 %v835, %v834
        %v860 = vpack.c.b16 %v837, %v836
        %v861 = vpack.c.b16 %v839, %v838
        %v862 = vpack.c.b16 %v841, %v840
        %v863 = vpack.c.b16 %v843, %v842
        %v864 = vpack.c.b16 %v845, %v844
        %v865 = vpack.c.b16 %v847, %v846
        %v866 = vpack.c.b16 %v849, %v848
        %v867 = vpack.c.b16 %v851, %v850
        %884 = vmatprep.subr.bf16.mxu0 0
        %885 = vmatpush1.bf16.msra.mxu0 %v852
        %886 = vmatprep.subr.bf16.mxu0 0
        %887 = vmatpush1.bf16.msra.mxu0 %v853
        %888 = vmatprep.subr.bf16.mxu0 0
        %889 = vmatpush1.bf16.msra.mxu0 %v854
        %890 = vmatprep.subr.bf16.mxu0 0
        %891 = vmatpush1.bf16.msra.mxu0 %v855
        %892 = vmatprep.subr.bf16.mxu0 0
        %893 = vmatpush1.bf16.msra.mxu0 %v856
        %894 = vmatprep.subr.bf16.mxu0 0
        %895 = vmatpush1.bf16.msra.mxu0 %v857
        %896 = vmatprep.subr.bf16.mxu0 0
        %897 = vmatpush1.bf16.msra.mxu0 %v858
        %898 = vmatprep.subr.bf16.mxu0 0
        %899 = vmatpush1.bf16.msra.mxu0 %v859
        %900 = vmatprep.subr.bf16.mxu0 0
        %901 = vmatpush1.bf16.msra.mxu0 %v860
        %902 = vmatprep.subr.bf16.mxu0 0
        %903 = vmatpush1.bf16.msra.mxu0 %v861
        %904 = vmatprep.subr.bf16.mxu0 0
        %905 = vmatpush1.bf16.msra.mxu0 %v862
        %906 = vmatprep.subr.bf16.mxu0 0
        %907 = vmatpush1.bf16.msra.mxu0 %v863
        %908 = vmatprep.subr.bf16.mxu0 0
        %909 = vmatpush1.bf16.msra.mxu0 %v864
        %910 = vmatprep.subr.bf16.mxu0 0
        %911 = vmatpush1.bf16.msra.mxu0 %v865
        %912 = vmatprep.subr.bf16.mxu0 0
        %913 = vmatpush1.bf16.msra.mxu0 %v866
        %914 = vmatprep.subr.bf16.mxu0 0
        %915 = vmatpush1.bf16.msra.mxu0 %v867
        %916 = vmatprep.mubr.bf16.mxu0 %v718
        %917 = vmatmul.mubr.bf16.gmra.mrb[0].mxu0 %v717
        %v918 = vpop.f32.mrb[0].mxu0
        %v919 = vadd.f32 %v786, %v918
        %v920 = vpop.f32.mrb[0].mxu0
        %v921 = vpop.f32.mrb[0].mxu0
        %v922 = vadd.f32 %v786, %v921
        %v923 = vpop.f32.mrb[0].mxu0
        %924 = vmatprep.mubr.bf16.mxu0 %v720
        %925 = vmatmul.mubr.bf16.gmra.mrb[0].mxu0 %v719
        %v926 = vpop.f32.mrb[0].mxu0
        %v927 = vadd.f32 %v786, %v926
        %v928 = vpop.f32.mrb[0].mxu0
        %v929 = vpop.f32.mrb[0].mxu0
        %v930 = vadd.f32 %v786, %v929
        %v931 = vpop.f32.mrb[0].mxu0
        %932 = vmatprep.mubr.bf16.mxu0 %v722
        %933 = vmatmul.mubr.bf16.gmra.mrb[0].mxu0 %v721
        %v934 = vpop.f32.mrb[0].mxu0
        %v935 = vadd.f32 %v786, %v934
        %v936 = vpop.f32.mrb[0].mxu0
        %v937 = vpop.f32.mrb[0].mxu0
        %v938 = vadd.f32 %v786, %v937
        %v939 = vpop.f32.mrb[0].mxu0
        %940 = vmatprep.mubr.bf16.mxu0 %v724
        %941 = vmatmul.mubr.bf16.gmra.mrb[0].mxu0 %v723
        %v942 = vpop.f32.mrb[0].mxu0
        %v943 = vadd.f32 %v786, %v942
        %v944 = vpop.f32.mrb[0].mxu0
        %v945 = vpop.f32.mrb[0].mxu0
        %v946 = vadd.f32 %v786, %v945
        %v947 = vpop.f32.mrb[0].mxu0
        %948 = vmatprep.mubr.bf16.mxu0 %v726
        %949 = vmatmul.mubr.bf16.gmra.mrb[0].mxu0 %v725
        %v950 = vpop.f32.mrb[0].mxu0
        %v951 = vadd.f32 %v786, %v950
        %v952 = vpop.f32.mrb[0].mxu0
        %v953 = vpop.f32.mrb[0].mxu0
        %v954 = vadd.f32 %v786, %v953
        %v955 = vpop.f32.mrb[0].mxu0
        %956 = vmatprep.mubr.bf16.mxu0 %v728
        %957 = vmatmul.mubr.bf16.gmra.mrb[0].mxu0 %v727
        %v958 = vpop.f32.mrb[0].mxu0
        %v959 = vadd.f32 %v786, %v958
        %v960 = vpop.f32.mrb[0].mxu0
        %v961 = vpop.f32.mrb[0].mxu0
        %v962 = vadd.f32 %v786, %v961
        %v963 = vpop.f32.mrb[0].mxu0
        %964 = vmatprep.mubr.bf16.mxu0 %v730
        %965 = vmatmul.mubr.bf16.gmra.mrb[0].mxu0 %v729
        %v966 = vpop.f32.mrb[0].mxu0
        %v967 = vadd.f32 %v786, %v966
        %v968 = vpop.f32.mrb[0].mxu0
        %v969 = vpop.f32.mrb[0].mxu0
        %v970 = vadd.f32 %v786, %v969
        %v971 = vpop.f32.mrb[0].mxu0
        %972 = vmatprep.mubr.bf16.mxu0 %v732
        %973 = vmatmul.mubr.bf16.gmra.mrb[0].mxu0 %v731
        %v974 = vpop.f32.mrb[0].mxu0
        %v975 = vadd.f32 %v786, %v974
        %v976 = vpop.f32.mrb[0].mxu0
        %v977 = vpop.f32.mrb[0].mxu0
        %v978 = vadd.f32 %v786, %v977
        %v979 = vpop.f32.mrb[0].mxu0
        %980 = vmatprep.mubr.bf16.mxu0 %v734
        %981 = vmatmul.mubr.bf16.gmra.mrb[0].mxu0 %v733
        %v982 = vpop.f32.mrb[0].mxu0
        %v983 = vadd.f32 %v786, %v982
        %v984 = vpop.f32.mrb[0].mxu0
        %v985 = vpop.f32.mrb[0].mxu0
        %v986 = vadd.f32 %v786, %v985
        %v987 = vpop.f32.mrb[0].mxu0
        %988 = vmatprep.mubr.bf16.mxu0 %v736
        %989 = vmatmul.mubr.bf16.gmra.mrb[0].mxu0 %v735
        %v990 = vpop.f32.mrb[0].mxu0
        %v991 = vadd.f32 %v786, %v990
        %v992 = vpop.f32.mrb[0].mxu0
        %v993 = vpop.f32.mrb[0].mxu0
        %v994 = vadd.f32 %v786, %v993
        %v995 = vpop.f32.mrb[0].mxu0
        %996 = vmatprep.mubr.bf16.mxu0 %v738
        %997 = vmatmul.mubr.bf16.gmra.mrb[0].mxu0 %v737
        %v998 = vpop.f32.mrb[0].mxu0
        %v999 = vadd.f32 %v786, %v998
        %v1000 = vpop.f32.mrb[0].mxu0
        %v1001 = vpop.f32.mrb[0].mxu0
        %v1002 = vadd.f32 %v786, %v1001
        %v1003 = vpop.f32.mrb[0].mxu0
        %1004 = vmatprep.mubr.bf16.mxu0 %v740
        %1005 = vmatmul.mubr.bf16.gmra.mrb[0].mxu0 %v739
        %v1006 = vpop.f32.mrb[0].mxu0
        %v1007 = vadd.f32 %v786, %v1006
        %v1008 = vpop.f32.mrb[0].mxu0
        %v1009 = vpop.f32.mrb[0].mxu0
        %v1010 = vadd.f32 %v786, %v1009
        %v1011 = vpop.f32.mrb[0].mxu0
        %1012 = vmatprep.mubr.bf16.mxu0 %v742
        %1013 = vmatmul.mubr.bf16.gmra.mrb[0].mxu0 %v741
        %v1014 = vpop.f32.mrb[0].mxu0
        %v1015 = vadd.f32 %v786, %v1014
        %v1016 = vpop.f32.mrb[0].mxu0
        %v1017 = vpop.f32.mrb[0].mxu0
        %v1018 = vadd.f32 %v786, %v1017
        %v1019 = vpop.f32.mrb[0].mxu0
        %1020 = vmatprep.mubr.bf16.mxu0 %v744
        %1021 = vmatmul.mubr.bf16.gmra.mrb[0].mxu0 %v743
        %v1022 = vpop.f32.mrb[0].mxu0
        %v1023 = vadd.f32 %v786, %v1022
        %v1024 = vpop.f32.mrb[0].mxu0
        %v1025 = vpop.f32.mrb[0].mxu0
        %v1026 = vadd.f32 %v786, %v1025
        %v1027 = vpop.f32.mrb[0].mxu0
        %1028 = vmatprep.mubr.bf16.mxu0 %v746
        %1029 = vmatmul.mubr.bf16.gmra.mrb[0].mxu0 %v745
        %v1030 = vpop.f32.mrb[0].mxu0
        %v1031 = vadd.f32 %v786, %v1030
        %v1032 = vpop.f32.mrb[0].mxu0
        %v1033 = vpop.f32.mrb[0].mxu0
        %v1034 = vadd.f32 %v786, %v1033
        %v1035 = vpop.f32.mrb[0].mxu0
        %1036 = vmatprep.mubr.bf16.mxu0 %v748
        %1037 = vmatmul.mubr.bf16.gmra.mrb[0].mxu0 %v747
        %v1038 = vpop.f32.mrb[0].mxu0
        %v1039 = vadd.f32 %v786, %v1038
        %v1040 = vpop.f32.mrb[0].mxu0
        %v1041 = vpop.f32.mrb[0].mxu0
        %v1042 = vadd.f32 %v786, %v1041
        %v1043 = vpop.f32.mrb[0].mxu0
        %1044 = vdwg.mxu0
        %v1045 = vmax.f32 %v919, 0.0
        %v1046 = vmax.f32 %v922, 0.0
        %v1047 = vmax.f32 %v927, 0.0
        %v1048 = vmax.f32 %v930, 0.0
        %v1049 = vmax.f32 %v935, 0.0
        %v1050 = vmax.f32 %v938, 0.0
        %v1051 = vmax.f32 %v943, 0.0
        %v1052 = vmax.f32 %v946, 0.0
        %v1053 = vmax.f32 %v951, 0.0
        %v1054 = vmax.f32 %v954, 0.0
        %v1055 = vmax.f32 %v959, 0.0
        %v1056 = vmax.f32 %v962, 0.0
        %v1057 = vmax.f32 %v967, 0.0
        %v1058 = vmax.f32 %v970, 0.0
        %v1059 = vmax.f32 %v975, 0.0
        %v1060 = vmax.f32 %v978, 0.0
        %v1061 = vmax.f32 %v983, 0.0
        %v1062 = vmax.f32 %v986, 0.0
        %v1063 = vmax.f32 %v991, 0.0
        %v1064 = vmax.f32 %v994, 0.0
        %v1065 = vmax.f32 %v999, 0.0
        %v1066 = vmax.f32 %v1002, 0.0
        %v1067 = vmax.f32 %v1007, 0.0
        %v1068 = vmax.f32 %v1010, 0.0
        %v1069 = vmax.f32 %v1015, 0.0
        %v1070 = vmax.f32 %v1018, 0.0
        %v1071 = vmax.f32 %v1023, 0.0
        %v1072 = vmax.f32 %v1026, 0.0
        %v1073 = vmax.f32 %v1031, 0.0
        %v1074 = vmax.f32 %v1034, 0.0
        %v1075 = vmax.f32 %v1039, 0.0
        %v1076 = vmax.f32 %v1042, 0.0
        %v1077 = vpack.c.bf16 %v1046, %v1045
        %v1078 = vpack.c.bf16 %v1048, %v1047
        %v1079 = vpack.c.bf16 %v1050, %v1049
        %v1080 = vpack.c.bf16 %v1052, %v1051
        %v1081 = vpack.c.bf16 %v1054, %v1053
        %v1082 = vpack.c.bf16 %v1056, %v1055
        %v1083 = vpack.c.bf16 %v1058, %v1057
        %v1084 = vpack.c.bf16 %v1060, %v1059
        %v1085 = vpack.c.bf16 %v1062, %v1061
        %v1086 = vpack.c.bf16 %v1064, %v1063
        %v1087 = vpack.c.bf16 %v1066, %v1065
        %v1088 = vpack.c.bf16 %v1068, %v1067
        %v1089 = vpack.c.bf16 %v1070, %v1069
        %v1090 = vpack.c.bf16 %v1072, %v1071
        %v1091 = vpack.c.bf16 %v1074, %v1073
        %v1092 = vpack.c.bf16 %v1076, %v1075
        %v1093 = vld [vmem:[#allocation8] sm:$0xf]
        %v1094 = vld [vmem:[#allocation8 + $0x4] sm:$0xf]
        %v1095 = vld [vmem:[#allocation8 + $0x8] sm:$0xf]
        %v1096 = vld [vmem:[#allocation8 + $0xc] sm:$0xf]
        %v1097 = vld [vmem:[#allocation8 + $0x10] sm:$0xf]
        %v1098 = vld [vmem:[#allocation8 + $0x14] sm:$0xf]
        %v1099 = vld [vmem:[#allocation8 + $0x18] sm:$0xf]
        %v1100 = vld [vmem:[#allocation8 + $0x1c] sm:$0xf]
        %v1101 = vld [vmem:[#allocation8 + $0x20] sm:$0xf]
        %v1102 = vld [vmem:[#allocation8 + $0x24] sm:$0xf]
        %v1103 = vld [vmem:[#allocation8 + $0x28] sm:$0xf]
        %v1104 = vld [vmem:[#allocation8 + $0x2c] sm:$0xf]
        %v1105 = vld [vmem:[#allocation8 + $0x30] sm:$0xf]
        %v1106 = vld [vmem:[#allocation8 + $0x34] sm:$0xf]
        %v1107 = vld [vmem:[#allocation8 + $0x38] sm:$0xf]
        %v1108 = vld [vmem:[#allocation8 + $0x3c] sm:$0xf]
        %v1109 = vld [vmem:[%s4 + $0x3] sm:$0x1]
        %v1111 = vlaneseq
        %v1112 = vshrl.u32 %v1111, 7
        %v1113 = vsub.s32 0, %v1112
        %v1114 = vrot.slane %v1109, %v1113
        %v1132 = vunpack.c.l.b16 %v1093
        %v1133 = vunpack.c.l.b16 %v1094
        %v1134 = vunpack.c.l.b16 %v1095
        %v1135 = vunpack.c.l.b16 %v1096
        %v1136 = vunpack.c.l.b16 %v1097
        %v1137 = vunpack.c.l.b16 %v1098
        %v1138 = vunpack.c.l.b16 %v1099
        %v1139 = vunpack.c.l.b16 %v1100
        %v1140 = vunpack.c.l.b16 %v1101
        %v1141 = vunpack.c.l.b16 %v1102
        %v1142 = vunpack.c.l.b16 %v1103
        %v1143 = vunpack.c.l.b16 %v1104
        %v1144 = vunpack.c.l.b16 %v1105
        %v1145 = vunpack.c.l.b16 %v1106
        %v1146 = vunpack.c.l.b16 %v1107
        %v1147 = vunpack.c.l.b16 %v1108
        %v1148 = vpack.c.b16 %v1133, %v1132
        %v1149 = vpack.c.b16 %v1135, %v1134
        %v1150 = vpack.c.b16 %v1137, %v1136
        %v1151 = vpack.c.b16 %v1139, %v1138
        %v1152 = vpack.c.b16 %v1141, %v1140
        %v1153 = vpack.c.b16 %v1143, %v1142
        %v1154 = vpack.c.b16 %v1145, %v1144
        %v1155 = vpack.c.b16 %v1147, %v1146
        %1164 = vmatprep.subr.bf16.mxu0 0
        %1165 = vmatpush1.bf16.msra.mxu0 %v1148
        %1166 = vmatprep.subr.bf16.mxu0 0
        %1167 = vmatpush1.bf16.msra.mxu0 %v1149
        %1168 = vmatprep.subr.bf16.mxu0 0
        %1169 = vmatpush1.bf16.msra.mxu0 %v1150
        %1170 = vmatprep.subr.bf16.mxu0 0
        %1171 = vmatpush1.bf16.msra.mxu0 %v1151
        %1172 = vmatprep.subr.bf16.mxu0 0
        %1173 = vmatpush1.bf16.msra.mxu0 %v1152
        %1174 = vmatprep.subr.bf16.mxu0 0
        %1175 = vmatpush1.bf16.msra.mxu0 %v1153
        %1176 = vmatprep.subr.bf16.mxu0 0
        %1177 = vmatpush1.bf16.msra.mxu0 %v1154
        %1178 = vmatprep.subr.bf16.mxu0 0
        %1179 = vmatpush1.bf16.msra.mxu0 %v1155
        %1180 = vmatprep.subr.bf16.mxu0 0
        %1181 = vmatpush1.bf16.msra.mxu0 0
        %1182 = vmatprep.subr.bf16.mxu0 0
        %1183 = vmatpush1.bf16.msra.mxu0 0
        %1184 = vmatprep.subr.bf16.mxu0 0
        %1185 = vmatpush1.bf16.msra.mxu0 0
        %1186 = vmatprep.subr.bf16.mxu0 0
        %1187 = vmatpush1.bf16.msra.mxu0 0
        %1188 = vmatprep.subr.bf16.mxu0 0
        %1189 = vmatpush1.bf16.msra.mxu0 0
        %1190 = vmatprep.subr.bf16.mxu0 0
        %1191 = vmatpush1.bf16.msra.mxu0 0
        %1192 = vmatprep.subr.bf16.mxu0 0
        %1193 = vmatpush1.bf16.msra.mxu0 0
        %1194 = vmatprep.subr.bf16.mxu0 0
        %1195 = vmatpush1.bf16.msra.mxu0 0
        %1196 = vmatprep.mubr.bf16.mxu0 0
        %1197 = vmatmul.mubr.bf16.gmra.mrb[0].mxu0 %v1077
        %v1198 = vpop.f32.mrb[0].mxu0
        %v1199 = vadd.f32 %v1114, %v1198
        %v1200 = vpop.f32.mrb[0].mxu0
        %v1201 = vpop.f32.mrb[0].mxu0
        %v1202 = vadd.f32 %v1114, %v1201
        %v1203 = vpop.f32.mrb[0].mxu0
        %1204 = vmatprep.mubr.bf16.mxu0 0
        %1205 = vmatmul.mubr.bf16.gmra.mrb[0].mxu0 %v1078
        %v1206 = vpop.f32.mrb[0].mxu0
        %v1207 = vadd.f32 %v1114, %v1206
        %v1208 = vpop.f32.mrb[0].mxu0
        %v1209 = vpop.f32.mrb[0].mxu0
        %v1210 = vadd.f32 %v1114, %v1209
        %v1211 = vpop.f32.mrb[0].mxu0
        %1212 = vmatprep.mubr.bf16.mxu0 0
        %1213 = vmatmul.mubr.bf16.gmra.mrb[0].mxu0 %v1079
        %v1214 = vpop.f32.mrb[0].mxu0
        %v1215 = vadd.f32 %v1114, %v1214
        %v1216 = vpop.f32.mrb[0].mxu0
        %v1217 = vpop.f32.mrb[0].mxu0
        %v1218 = vadd.f32 %v1114, %v1217
        %v1219 = vpop.f32.mrb[0].mxu0
        %1220 = vmatprep.mubr.bf16.mxu0 0
        %1221 = vmatmul.mubr.bf16.gmra.mrb[0].mxu0 %v1080
        %v1222 = vpop.f32.mrb[0].mxu0
        %v1223 = vadd.f32 %v1114, %v1222
        %v1224 = vpop.f32.mrb[0].mxu0
        %v1225 = vpop.f32.mrb[0].mxu0
        %v1226 = vadd.f32 %v1114, %v1225
        %v1227 = vpop.f32.mrb[0].mxu0
        %1228 = vmatprep.mubr.bf16.mxu0 0
        %1229 = vmatmul.mubr.bf16.gmra.mrb[0].mxu0 %v1081
        %v1230 = vpop.f32.mrb[0].mxu0
        %v1231 = vadd.f32 %v1114, %v1230
        %v1232 = vpop.f32.mrb[0].mxu0
        %v1233 = vpop.f32.mrb[0].mxu0
        %v1234 = vadd.f32 %v1114, %v1233
        %v1235 = vpop.f32.mrb[0].mxu0
        %1236 = vmatprep.mubr.bf16.mxu0 0
        %1237 = vmatmul.mubr.bf16.gmra.mrb[0].mxu0 %v1082
        %v1238 = vpop.f32.mrb[0].mxu0
        %v1239 = vadd.f32 %v1114, %v1238
        %v1240 = vpop.f32.mrb[0].mxu0
        %v1241 = vpop.f32.mrb[0].mxu0
        %v1242 = vadd.f32 %v1114, %v1241
        %v1243 = vpop.f32.mrb[0].mxu0
        %1244 = vmatprep.mubr.bf16.mxu0 0
        %1245 = vmatmul.mubr.bf16.gmra.mrb[0].mxu0 %v1083
        %v1246 = vpop.f32.mrb[0].mxu0
        %v1247 = vadd.f32 %v1114, %v1246
        %v1248 = vpop.f32.mrb[0].mxu0
        %v1249 = vpop.f32.mrb[0].mxu0
        %v1250 = vadd.f32 %v1114, %v1249
        %v1251 = vpop.f32.mrb[0].mxu0
        %1252 = vmatprep.mubr.bf16.mxu0 0
        %1253 = vmatmul.mubr.bf16.gmra.mrb[0].mxu0 %v1084
        %v1254 = vpop.f32.mrb[0].mxu0
        %v1255 = vadd.f32 %v1114, %v1254
        %v1256 = vpop.f32.mrb[0].mxu0
        %v1257 = vpop.f32.mrb[0].mxu0
        %v1258 = vadd.f32 %v1114, %v1257
        %v1259 = vpop.f32.mrb[0].mxu0
        %1260 = vmatprep.mubr.bf16.mxu0 0
        %1261 = vmatmul.mubr.bf16.gmra.mrb[0].mxu0 %v1085
        %v1262 = vpop.f32.mrb[0].mxu0
        %v1263 = vadd.f32 %v1114, %v1262
        %v1264 = vpop.f32.mrb[0].mxu0
        %v1265 = vpop.f32.mrb[0].mxu0
        %v1266 = vadd.f32 %v1114, %v1265
        %v1267 = vpop.f32.mrb[0].mxu0
        %1268 = vmatprep.mubr.bf16.mxu0 0
        %1269 = vmatmul.mubr.bf16.gmra.mrb[0].mxu0 %v1086
        %v1270 = vpop.f32.mrb[0].mxu0
        %v1271 = vadd.f32 %v1114, %v1270
        %v1272 = vpop.f32.mrb[0].mxu0
        %v1273 = vpop.f32.mrb[0].mxu0
        %v1274 = vadd.f32 %v1114, %v1273
        %v1275 = vpop.f32.mrb[0].mxu0
        %1276 = vmatprep.mubr.bf16.mxu0 0
        %1277 = vmatmul.mubr.bf16.gmra.mrb[0].mxu0 %v1087
        %v1278 = vpop.f32.mrb[0].mxu0
        %v1279 = vadd.f32 %v1114, %v1278
        %v1280 = vpop.f32.mrb[0].mxu0
        %v1281 = vpop.f32.mrb[0].mxu0
        %v1282 = vadd.f32 %v1114, %v1281
        %v1283 = vpop.f32.mrb[0].mxu0
        %1284 = vmatprep.mubr.bf16.mxu0 0
        %1285 = vmatmul.mubr.bf16.gmra.mrb[0].mxu0 %v1088
        %v1286 = vpop.f32.mrb[0].mxu0
        %v1287 = vadd.f32 %v1114, %v1286
        %v1288 = vpop.f32.mrb[0].mxu0
        %v1289 = vpop.f32.mrb[0].mxu0
        %v1290 = vadd.f32 %v1114, %v1289
        %v1291 = vpop.f32.mrb[0].mxu0
        %1292 = vmatprep.mubr.bf16.mxu0 0
        %1293 = vmatmul.mubr.bf16.gmra.mrb[0].mxu0 %v1089
        %v1294 = vpop.f32.mrb[0].mxu0
        %v1295 = vadd.f32 %v1114, %v1294
        %v1296 = vpop.f32.mrb[0].mxu0
        %v1297 = vpop.f32.mrb[0].mxu0
        %v1298 = vadd.f32 %v1114, %v1297
        %v1299 = vpop.f32.mrb[0].mxu0
        %1300 = vmatprep.mubr.bf16.mxu0 0
        %1301 = vmatmul.mubr.bf16.gmra.mrb[0].mxu0 %v1090
        %v1302 = vpop.f32.mrb[0].mxu0
        %v1303 = vadd.f32 %v1114, %v1302
        %v1304 = vpop.f32.mrb[0].mxu0
        %v1305 = vpop.f32.mrb[0].mxu0
        %v1306 = vadd.f32 %v1114, %v1305
        %v1307 = vpop.f32.mrb[0].mxu0
        %1308 = vmatprep.mubr.bf16.mxu0 0
        %1309 = vmatmul.mubr.bf16.gmra.mrb[0].mxu0 %v1091
        %v1310 = vpop.f32.mrb[0].mxu0
        %v1311 = vadd.f32 %v1114, %v1310
        %v1312 = vpop.f32.mrb[0].mxu0
        %v1313 = vpop.f32.mrb[0].mxu0
        %v1314 = vadd.f32 %v1114, %v1313
        %v1315 = vpop.f32.mrb[0].mxu0
        %1316 = vmatprep.mubr.bf16.mxu0 0
        %1317 = vmatmul.mubr.bf16.gmra.mrb[0].mxu0 %v1092
        %v1318 = vpop.f32.mrb[0].mxu0
        %v1319 = vadd.f32 %v1114, %v1318
        %v1320 = vpop.f32.mrb[0].mxu0
        %v1321 = vpop.f32.mrb[0].mxu0
        %v1322 = vadd.f32 %v1114, %v1321
        %v1323 = vpop.f32.mrb[0].mxu0
        %1324 = vdwg.mxu0
        %v1325 = vpack.c.bf16 %v1202, %v1199
        %v1326 = vpack.c.bf16 %v1210, %v1207
        %v1327 = vpack.c.bf16 %v1218, %v1215
        %v1328 = vpack.c.bf16 %v1226, %v1223
        %v1329 = vpack.c.bf16 %v1234, %v1231
        %v1330 = vpack.c.bf16 %v1242, %v1239
        %v1331 = vpack.c.bf16 %v1250, %v1247
        %v1332 = vpack.c.bf16 %v1258, %v1255
        %v1333 = vpack.c.bf16 %v1266, %v1263
        %v1334 = vpack.c.bf16 %v1274, %v1271
        %v1335 = vpack.c.bf16 %v1282, %v1279
        %v1336 = vpack.c.bf16 %v1290, %v1287
        %v1337 = vpack.c.bf16 %v1298, %v1295
        %v1338 = vpack.c.bf16 %v1306, %v1303
        %v1339 = vpack.c.bf16 %v1314, %v1311
        %v1340 = vpack.c.bf16 %v1322, %v1319
        %v1357 = vunpack.c.l.b16 %v1325
        %v1358 = vunpack.c.h.b16 %v1325
        %v1359 = vunpack.c.l.b16 %v1326
        %v1360 = vunpack.c.h.b16 %v1326
        %v1361 = vunpack.c.l.b16 %v1327
        %v1362 = vunpack.c.h.b16 %v1327
        %v1363 = vunpack.c.l.b16 %v1328
        %v1364 = vunpack.c.h.b16 %v1328
        %v1365 = vunpack.c.l.b16 %v1329
        %v1366 = vunpack.c.h.b16 %v1329
        %v1367 = vunpack.c.l.b16 %v1330
        %v1368 = vunpack.c.h.b16 %v1330
        %v1369 = vunpack.c.l.b16 %v1331
        %v1370 = vunpack.c.h.b16 %v1331
        %v1371 = vunpack.c.l.b16 %v1332
        %v1372 = vunpack.c.h.b16 %v1332
        %v1373 = vunpack.c.l.b16 %v1333
        %v1374 = vunpack.c.h.b16 %v1333
        %v1375 = vunpack.c.l.b16 %v1334
        %v1376 = vunpack.c.h.b16 %v1334
        %v1377 = vunpack.c.l.b16 %v1335
        %v1378 = vunpack.c.h.b16 %v1335
        %v1379 = vunpack.c.l.b16 %v1336
        %v1380 = vunpack.c.h.b16 %v1336
        %v1381 = vunpack.c.l.b16 %v1337
        %v1382 = vunpack.c.h.b16 %v1337
        %v1383 = vunpack.c.l.b16 %v1338
        %v1384 = vunpack.c.h.b16 %v1338
        %v1385 = vunpack.c.l.b16 %v1339
        %v1386 = vunpack.c.h.b16 %v1339
        %v1387 = vunpack.c.l.b16 %v1340
        %v1388 = vunpack.c.h.b16 %v1340
        %v1389 = vpack.c.b16 %v1357, %v1357
        %v1390 = vpack.c.b16 %v1358, %v1358
        %v1391 = vpack.c.b16 %v1359, %v1359
        %v1392 = vpack.c.b16 %v1360, %v1360
        %v1393 = vpack.c.b16 %v1361, %v1361
        %v1394 = vpack.c.b16 %v1362, %v1362
        %v1395 = vpack.c.b16 %v1363, %v1363
        %v1396 = vpack.c.b16 %v1364, %v1364
        %v1397 = vpack.c.b16 %v1365, %v1365
        %v1398 = vpack.c.b16 %v1366, %v1366
        %v1399 = vpack.c.b16 %v1367, %v1367
        %v1400 = vpack.c.b16 %v1368, %v1368
        %v1401 = vpack.c.b16 %v1369, %v1369
        %v1402 = vpack.c.b16 %v1370, %v1370
        %v1403 = vpack.c.b16 %v1371, %v1371
        %v1404 = vpack.c.b16 %v1372, %v1372
        %v1405 = vpack.c.b16 %v1373, %v1373
        %v1406 = vpack.c.b16 %v1374, %v1374
        %v1407 = vpack.c.b16 %v1375, %v1375
        %v1408 = vpack.c.b16 %v1376, %v1376
        %v1409 = vpack.c.b16 %v1377, %v1377
        %v1410 = vpack.c.b16 %v1378, %v1378
        %v1411 = vpack.c.b16 %v1379, %v1379
        %v1412 = vpack.c.b16 %v1380, %v1380
        %v1413 = vpack.c.b16 %v1381, %v1381
        %v1414 = vpack.c.b16 %v1382, %v1382
        %v1415 = vpack.c.b16 %v1383, %v1383
        %v1416 = vpack.c.b16 %v1384, %v1384
        %v1417 = vpack.c.b16 %v1385, %v1385
        %v1418 = vpack.c.b16 %v1386, %v1386
        %v1419 = vpack.c.b16 %v1387, %v1387
        %v1420 = vpack.c.b16 %v1388, %v1388
        %1453 = vst [vmem:[%s292] sm:$0xf] %v1389
        %1454 = vst [vmem:[%s292 + $0x4] sm:$0xf] %v1390
        %1455 = vst [vmem:[%s292 + $0x8] sm:$0xf] %v1391
        %1456 = vst [vmem:[%s292 + $0xc] sm:$0xf] %v1392
        %1457 = vst [vmem:[%s292 + $0x10] sm:$0xf] %v1393
        %1458 = vst [vmem:[%s292 + $0x14] sm:$0xf] %v1394
        %1459 = vst [vmem:[%s292 + $0x18] sm:$0xf] %v1395
        %1460 = vst [vmem:[%s292 + $0x1c] sm:$0xf] %v1396
        %1461 = vst [vmem:[%s292 + $0x20] sm:$0xf] %v1397
        %1462 = vst [vmem:[%s292 + $0x24] sm:$0xf] %v1398
        %1463 = vst [vmem:[%s292 + $0x28] sm:$0xf] %v1399
        %1464 = vst [vmem:[%s292 + $0x2c] sm:$0xf] %v1400
        %1465 = vst [vmem:[%s292 + $0x30] sm:$0xf] %v1401
        %1466 = vst [vmem:[%s292 + $0x34] sm:$0xf] %v1402
        %1467 = vst [vmem:[%s292 + $0x38] sm:$0xf] %v1403
        %1468 = vst [vmem:[%s292 + $0x3c] sm:$0xf] %v1404
        %1469 = vst [vmem:[%s292 + $0x40] sm:$0xf] %v1405
        %1470 = vst [vmem:[%s292 + $0x44] sm:$0xf] %v1406
        %1471 = vst [vmem:[%s292 + $0x48] sm:$0xf] %v1407
        %1472 = vst [vmem:[%s292 + $0x4c] sm:$0xf] %v1408
        %1473 = vst [vmem:[%s292 + $0x50] sm:$0xf] %v1409
        %1474 = vst [vmem:[%s292 + $0x54] sm:$0xf] %v1410
        %1475 = vst [vmem:[%s292 + $0x58] sm:$0xf] %v1411
        %1476 = vst [vmem:[%s292 + $0x5c] sm:$0xf] %v1412
        %1477 = vst [vmem:[%s292 + $0x60] sm:$0xf] %v1413
        %1478 = vst [vmem:[%s292 + $0x64] sm:$0xf] %v1414
        %1479 = vst [vmem:[%s292 + $0x68] sm:$0xf] %v1415
        %1480 = vst [vmem:[%s292 + $0x6c] sm:$0xf] %v1416
        %1481 = vst [vmem:[%s292 + $0x70] sm:$0xf] %v1417
        %1482 = vst [vmem:[%s292 + $0x74] sm:$0xf] %v1418
        %1483 = vst [vmem:[%s292 + $0x78] sm:$0xf] %v1419
        %1484 = vst [vmem:[%s292 + $0x7c] sm:$0xf] %v1420
        %s1485 = sand.u32 %s142, 1
        %s1486 = scalar_lea.sflag [#allocation4], %s1485
        %s1487 = sand.u32 %s142, 1
        %s1488 = smul.addr %s1487, 128
        %s1489 = scalar_lea.vmem [#allocation10], %s1488
        // Predicated region
        $region57: #{cifar10_forward_padded.1} parent=39 // pred_check
          %p1490 = pneg %p152
        $region58: #{cifar10_forward_padded.1} parent=39 // pred_check_branch
          %1492 = sbr.rel (%p1490) target = $region60
        $region59: #{cifar10_forward_padded.1} parent=39 // pred_region
          %s1493 = smul.u32 32, %s24
          %s1494 = ssub.s32 38, %s1493
          %p1495 = scmp.lt.s32.totalorder %s1494, 32
          %s1496 = scalar_select %p1495, %s1494, 32
          %s1497 = smul.u32 64, %s1496
          %s1499 = ssub.s32 2048, %s1497
          %1500 = vsyncadd %s1486, %s1499
          %p1501 = scmp.ne.s32.totalorder 0, %s1497
          %s1502 = smul.addr %s1493, 64
          %s1503 = scalar_lea.hbm %s5, %s1502
          %s1504 = smul.u32 4, %s1496
          %s1505 = sshll.u32 %s1489, 4
          %s1506 = int_to_ptr.vmem [resolvable:$true] %s1505
          %s1507 = sshll.u32 %s1504, 4
          %1511 = dma.vmem_to_hbm [thread:$0]  (%p1501), %s1506, %s1507, %s1503, %s1486, 64, 64, 4
        $region60: #{cifar10_forward_padded.1} parent=39 // pred_fallthru
          _
      $region40: #{cifar10_forward_padded.1} parent=5 // pred_fallthru
        _
      %p1512 = scmp.le.s32.totalorder 2, %s19
      // Predicated region
      $region61: #{cifar10_forward_padded.1} parent=5 // pred_check
        %p1513 = pneg %p1512
      $region62: #{cifar10_forward_padded.1} parent=5 // pred_check_branch
        %1515 = sbr.rel (%p1513) target = $region64
      $region63: #{cifar10_forward_padded.1} parent=5 // pred_region
        %s1516 = ssub.s32 %s19, 2
        // Predicated region
        $region65: #{cifar10_forward_padded.1} parent=63 // pred_check
          %p1517 = pneg %p158
        $region66: #{cifar10_forward_padded.1} parent=63 // pred_check_branch
          %1519 = sbr.rel (%p1517) target = $region68
        $region67: #{cifar10_forward_padded.1} parent=63 // pred_region
          %s1520 = sand.u32 %s143, 1
          %s1521 = scalar_lea.sflag [#allocation4], %s1520
          %s1522 = sand.u32 %s143, 1
          %s1523 = smul.addr %s1522, 128
          %s1524 = scalar_lea.vmem [#allocation10], %s1523
          %1525 = dma.done %s1521, 2048
        $region68: #{cifar10_forward_padded.1} parent=63 // pred_fallthru
          _
      $region64: #{cifar10_forward_padded.1} parent=5 // pred_fallthru
        _
    $region6: #{cifar10_forward_padded.1} parent=1 // loop_footer
      %s23 = sadd.s32 1, %s19
    $region7: #{cifar10_forward_padded.1} parent=1 // loop_footer_branch
      %18 = sbr.rel target = $region3
    $region8: #{cifar10_forward_padded.1} parent=1 // loop_exit
      _
    %1526 = vsyncpa [#allocation3], 1
    %s1527 = scalar_lea.sflag [#allocation3], 1
    %1528 = vsyncpa %s1527, 1
    %1529 = vsyncpa [#allocation6], 1
    %1530 = vsyncpa [#allocation9], 1
    %1531 = vsyncpa [#allocation4], 1
    %s1532 = scalar_lea.sflag [#allocation4], 1
    %1533 = vsyncpa %s1532, 1

</llo_original>
